<compile_context>
chip_gen: v6e
topology: v6e:2x2x1
jax: 0.10.0
libtpu: 0.0.40
codegen_flags: <defaults>
</compile_context>

<pallas_src>
import functools
import math

import jax
import jax.numpy as jnp
from jax.experimental import pallas as pl
from jax.experimental.pallas import tpu as pltpu

EPS = 1e-6


def encoder_layer_kernel(
    x_ref, bias_ref,
    ln1g_ref, ln1b_ref,
    wqkv_ref, bqkv_ref,
    wo_ref, bo_ref,
    ln2g_ref, ln2b_ref,
    w1_ref, b1_ref, w2_ref, b2_ref,
    o_ref,
    ctx_ref,                      # VMEM scratch (S, D) f32
    *, heads, head_dim,
):
    x = x_ref[0]                  # (S, D) f32
    S, D = x.shape
    bias = bias_ref[0]            # (1, S) f32 additive mask bias (0 or -1e18)

    # --- pre-attention LayerNorm (eps=1e-6), f32 ---
    mu = jnp.mean(x, axis=-1, keepdims=True)
    var = jnp.mean((x - mu) ** 2, axis=-1, keepdims=True)
    xn = (x - mu) * jax.lax.rsqrt(var + EPS)
    xn = xn * ln1g_ref[...] + ln1b_ref[...]
    xn_b = xn.astype(jnp.bfloat16)

    # --- fused Q|K|V projection: ONE lane-dense (S,D)x(D,3D) matmul ---
    # (query scale 1/sqrt(dh) already folded into the Wq/bq columns on host)
    qkv = jnp.dot(xn_b, wqkv_ref[...],
                  preferred_element_type=jnp.float32) + bqkv_ref[...]   # (S, 3D) f32
    qkv_b = qkv.astype(jnp.bfloat16)

    # Hoisted mask-bias broadcast (reused by every head).
    bias_full = jnp.broadcast_to(bias, (S, S))

    # --- per-head scaled-dot-product attention (f32 scores / softmax) ---
    dn = (((1,), (1,)), ((), ()))   # contract last dims: q @ k^T without a transpose
    for h in range(heads):
        q_h = qkv_b[:,          h * head_dim:          (h + 1) * head_dim]
        k_h = qkv_b[:,     D +  h * head_dim:     D + (h + 1) * head_dim]
        v_h = qkv_b[:, 2 * D +  h * head_dim: 2 * D + (h + 1) * head_dim]

        scores = jax.lax.dot_general(q_h, k_h, dn,
                                     preferred_element_type=jnp.float32)  # (S, S)
        scores = scores + bias_full                  # masked_fill(mask, -1e18)
        m = jnp.max(scores, axis=-1, keepdims=True)
        p = jnp.exp(scores - m)                      # unnormalized probs, f32
        inv = pl.reciprocal(jnp.sum(p, axis=-1, keepdims=True), approx=True)
        # PV matmul on unnormalized probs; normalize the small (S, dh) result.
        ctx_h = jnp.dot(p.astype(jnp.bfloat16), v_h,
                        preferred_element_type=jnp.float32)               # (S, dh)
        ctx_ref[:, h * head_dim:(h + 1) * head_dim] = ctx_h * inv

    # --- fused output projection: heads already contiguous on lanes ---
    context = jnp.dot(ctx_ref[...].astype(jnp.bfloat16), wo_ref[...],
                      preferred_element_type=jnp.float32) + bo_ref[...]

    # residual (dropout == identity in eval)
    out = context + x

    # --- PositionwiseFeedForward: pre-LN, ReLU, residual ---
    mu2 = jnp.mean(out, axis=-1, keepdims=True)
    var2 = jnp.mean((out - mu2) ** 2, axis=-1, keepdims=True)
    on = (out - mu2) * jax.lax.rsqrt(var2 + EPS)
    on = on * ln2g_ref[...] + ln2b_ref[...]
    h1 = jnp.dot(on.astype(jnp.bfloat16), w1_ref[...],
                 preferred_element_type=jnp.float32) + b1_ref[...]
    h1 = jnp.maximum(h1, 0.0)
    h2 = jnp.dot(h1.astype(jnp.bfloat16), w2_ref[...],
                 preferred_element_type=jnp.float32) + b2_ref[...]
    o_ref[0] = (h2 + out).astype(o_ref.dtype)


def transformer_encoder_layer(x, mask, params, *, heads):
    B, S, D = x.shape
    dh = D // heads
    d_ff = params["w1"].shape[-1]
    scale = 1.0 / math.sqrt(dh)

    # Host-side prep: fold query scale into Wq/bq, fuse Q|K|V weights/biases,
    # cast matmul weights to bf16, keep biases / LN params f32, precompute
    # the additive mask bias.
    wqkv = jnp.concatenate(
        [params["wq"] * scale, params["wk"], params["wv"]], axis=1
    ).astype(jnp.bfloat16)                                        # (D, 3D)
    bqkv = jnp.concatenate(
        [params["bq"] * scale, params["bk"], params["bv"]], axis=1
    ).astype(jnp.float32)                                         # (1, 3D)
    wo = params["wo"].astype(jnp.bfloat16)
    w1 = params["w1"].astype(jnp.bfloat16)
    w2 = params["w2"].astype(jnp.bfloat16)
    mask_bias = jnp.where(mask > 0, jnp.float32(-1e18), jnp.float32(0.0))  # (B,1,S)

    kernel = functools.partial(encoder_layer_kernel, heads=heads, head_dim=dh)

    # Grid-invariant weights: single-buffer (index_map is constant across the
    # grid, so multi-buffering buys nothing and doubles VMEM).
    def wspec(shape):
        return pl.BlockSpec(shape, lambda b: (0,) * len(shape),
                            pipeline_mode=pl.Buffered(1))

    in_specs = [
        pl.BlockSpec((1, S, D), lambda b: (b, 0, 0)),      # x
        pl.BlockSpec((1, 1, S), lambda b: (b, 0, 0)),      # additive mask bias
        wspec((1, D)), wspec((1, D)),                      # ln1 gamma / beta
        wspec((D, 3 * D)), wspec((1, 3 * D)),              # Wqkv (scaled q), bqkv
        wspec((D, D)), wspec((1, D)),                      # Wo, bo
        wspec((1, D)), wspec((1, D)),                      # ln2 gamma / beta
        wspec((D, d_ff)), wspec((1, d_ff)),                # W1, b1
        wspec((d_ff, D)), wspec((1, D)),                   # W2, b2
    ]

    # Cost estimate (advisory).
    flops = 2 * B * (4 * S * D * D + 2 * S * S * D + 2 * S * D * d_ff)
    transcendentals = B * heads * S * S + 4 * B * S
    weight_bytes = 2 * (4 * D * D + 2 * D * d_ff) + 4 * (8 * D + d_ff)
    bytes_accessed = 2 * B * S * D * 4 + B * S * 4 + weight_bytes
    cost = pl.CostEstimate(flops=int(flops),
                           transcendentals=int(transcendentals),
                           bytes_accessed=int(bytes_accessed))

    # Generation-aware VMEM budget: physical capacity minus ~16 MiB headroom
    # for Mosaic internal scratch / double-buffered activation blocks.
    try:
        vmem_cap = int(getattr(pltpu.get_tpu_info(), "vmem_capacity_bytes",
                               64 * 1024 * 1024))
    except Exception:  # pragma: no cover - conservative fallback off-TPU
        vmem_cap = 64 * 1024 * 1024
    scratch_est = 4 * (S * S + 8 * S * D + 2 * S * d_ff)   # f32 temporaries + ctx scratch
    act_est = 4 * 2 * (2 * S * D + S)                      # double-buffered x / out / bias
    need = weight_bytes + act_est + scratch_est
    vmem_limit = int(min(max(2 * need, 32 * 1024 * 1024),
                         vmem_cap - 16 * 1024 * 1024))
    # TODO(synk): if 2*need exceeds the cap (huge D/d_ff on v7x) chunk the FFN
    #             over d_ff instead of relying on the clamp.

    return pl.pallas_call(
        kernel,
        out_shape=jax.ShapeDtypeStruct((B, S, D), jnp.float32),
        grid_spec=pltpu.PrefetchScalarGridSpec(
            num_scalar_prefetch=0,
            grid=(B,),
            in_specs=in_specs,
            out_specs=pl.BlockSpec((1, S, D), lambda b: (b, 0, 0)),
            scratch_shapes=[pltpu.VMEM((S, D), jnp.float32)],   # per-head ctx
        ),
        compiler_params=pltpu.CompilerParams(
            dimension_semantics=("parallel",),
            vmem_limit_bytes=vmem_limit,
        ),
        cost_estimate=cost,
    )(x, mask_bias,
      params["ln1_g"], params["ln1_b"],
      wqkv, bqkv, wo, params["bo"],
      params["ln2_g"], params["ln2_b"],
      w1, params["b1"], w2, params["b2"])


def reference(x, mask, params, heads):
    """Pure-JAX f32 reference matching the PyTorch forward (eval mode)."""
    def ln(z, g, b):
        mu = jnp.mean(z, -1, keepdims=True)
        var = jnp.mean((z - mu) ** 2, -1, keepdims=True)
        return (z - mu) / jnp.sqrt(var + EPS) * g + b

    B, S, D = x.shape
    dh = D // heads
    xn = ln(x, params["ln1_g"], params["ln1_b"])
    q = xn @ params["wq"] + params["bq"]
    k = xn @ params["wk"] + params["bk"]
    v = xn @ params["wv"] + params["bv"]

    def split(t):  # (B,S,D) -> (B,H,S,dh)
        return t.reshape(B, S, heads, dh).transpose(0, 2, 1, 3)

    qh = split(q) / jnp.sqrt(jnp.float32(dh))
    kh, vh = split(k), split(v)
    scores = jnp.einsum("bhsd,bhtd->bhst", qh, kh)
    scores = jnp.where(mask[:, None, :, :] > 0, jnp.float32(-1e18), scores)
    attn = jax.nn.softmax(scores, axis=-1)
    ctx = jnp.einsum("bhst,bhtd->bhsd", attn, vh)
    ctx = ctx.transpose(0, 2, 1, 3).reshape(B, S, D)
    context = ctx @ params["wo"] + params["bo"]
    out = context + x
    on = ln(out, params["ln2_g"], params["ln2_b"])
    h1 = jax.nn.relu(on @ params["w1"] + params["b1"])
    return h1 @ params["w2"] + params["b2"] + out


if __name__ == "__main__":
    B, S, D, H, FF = 2, 8, 32, 4, 64

    key = jax.random.PRNGKey(0)
    ks = jax.random.split(key, 12)
    init = lambda k, shape: (0.05 * jax.random.normal(k, shape)).astype(jnp.float32)

    params = dict(
        ln1_g=jnp.ones((1, D), jnp.float32), ln1_b=jnp.zeros((1, D), jnp.float32),
        wq=init(ks[0], (D, D)), bq=init(ks[1], (1, D)),
        wk=init(ks[2], (D, D)), bk=init(ks[3], (1, D)),
        wv=init(ks[4], (D, D)), bv=init(ks[5], (1, D)),
        wo=init(ks[6], (D, D)), bo=init(ks[7], (1, D)),
        ln2_g=jnp.ones((1, D), jnp.float32), ln2_b=jnp.zeros((1, D), jnp.float32),
        w1=init(ks[8], (D, FF)), b1=init(ks[9], (1, FF)),
        w2=init(ks[10], (FF, D)), b2=init(ks[11], (1, D)),
    )

    x = jax.random.normal(jax.random.PRNGKey(1), (B, S, D), dtype=jnp.float32)
    # mask: (B, 1, S), 1.0 marks padded key positions (last 2 tokens of batch 1)
    mask = jnp.zeros((B, 1, S), jnp.float32).at[1, 0, S - 2:].set(1.0)

    out = transformer_encoder_layer(x, mask, params, heads=H)
    out = jax.block_until_ready(out)

    ref = reference(x, mask, params, H)
    assert out.shape == (B, S, D)
    # bf16 matmul operands (f32 accumulation) + approx reciprocal vs full-f32
    # reference -> loose tolerance (softmax rows sum to 1 only to ~1e-2 rel).
    assert jnp.allclose(out, ref, rtol=2e-2, atol=2e-2), float(jnp.max(jnp.abs(out - ref)))
    print("KERNEL_OK")
</pallas_src>

<mosaic_0001>
module attributes {stable_mosaic.version = 11 : i64} {
  func.func @encoder_layer_kernel(%arg0: i32, %arg1: memref<1x8x32xf32, #tpu.memory_space<vmem>>, %arg2: memref<1x1x8xf32, #tpu.memory_space<vmem>>, %arg3: memref<1x32xf32, #tpu.memory_space<vmem>>, %arg4: memref<1x32xf32, #tpu.memory_space<vmem>>, %arg5: memref<32x96xbf16, #tpu.memory_space<vmem>>, %arg6: memref<1x96xf32, #tpu.memory_space<vmem>>, %arg7: memref<32x32xbf16, #tpu.memory_space<vmem>>, %arg8: memref<1x32xf32, #tpu.memory_space<vmem>>, %arg9: memref<1x32xf32, #tpu.memory_space<vmem>>, %arg10: memref<1x32xf32, #tpu.memory_space<vmem>>, %arg11: memref<32x64xbf16, #tpu.memory_space<vmem>>, %arg12: memref<1x64xf32, #tpu.memory_space<vmem>>, %arg13: memref<64x32xbf16, #tpu.memory_space<vmem>>, %arg14: memref<1x32xf32, #tpu.memory_space<vmem>>, %arg15: memref<1x8x32xf32, #tpu.memory_space<vmem>>, %arg16: memref<8x32xf32, #tpu.memory_space<vmem>>) attributes {dimension_semantics = [#tpu.dimension_semantics<parallel>], iteration_bounds = array<i64: 2>, scalar_prefetch = 0 : i64, scratch_operands = 1 : i64, tpu.core_type = #tpu.core_type<tc>, window_params = [{transform_indices = @transform_0, window_bounds = array<i64: 1, 8, 32>}, {transform_indices = @transform_1, window_bounds = array<i64: 1, 1, 8>}, {pipeline_mode = #tpu.pipeline_mode<synchronous>, transform_indices = @transform_2, window_bounds = array<i64: 1, 32>}, {pipeline_mode = #tpu.pipeline_mode<synchronous>, transform_indices = @transform_3, window_bounds = array<i64: 1, 32>}, {pipeline_mode = #tpu.pipeline_mode<synchronous>, transform_indices = @transform_4, window_bounds = array<i64: 32, 96>}, {pipeline_mode = #tpu.pipeline_mode<synchronous>, transform_indices = @transform_5, window_bounds = array<i64: 1, 96>}, {pipeline_mode = #tpu.pipeline_mode<synchronous>, transform_indices = @transform_6, window_bounds = array<i64: 32, 32>}, {pipeline_mode = #tpu.pipeline_mode<synchronous>, transform_indices = @transform_7, window_bounds = array<i64: 1, 32>}, {pipeline_mode = #tpu.pipeline_mode<synchronous>, transform_indices = @transform_8, window_bounds = array<i64: 1, 32>}, {pipeline_mode = #tpu.pipeline_mode<synchronous>, transform_indices = @transform_9, window_bounds = array<i64: 1, 32>}, {pipeline_mode = #tpu.pipeline_mode<synchronous>, transform_indices = @transform_10, window_bounds = array<i64: 32, 64>}, {pipeline_mode = #tpu.pipeline_mode<synchronous>, transform_indices = @transform_11, window_bounds = array<i64: 1, 64>}, {pipeline_mode = #tpu.pipeline_mode<synchronous>, transform_indices = @transform_12, window_bounds = array<i64: 64, 32>}, {pipeline_mode = #tpu.pipeline_mode<synchronous>, transform_indices = @transform_13, window_bounds = array<i64: 1, 32>}, {transform_indices = @transform_14, window_bounds = array<i64: 1, 8, 32>}]} {
    %c0 = arith.constant 0 : index
    %c0_0 = arith.constant 0 : index
    %c0_1 = arith.constant 0 : index
    %0 = vector.load %arg1[%c0, %c0_0, %c0_1] : memref<1x8x32xf32, #tpu.memory_space<vmem>>, vector<1x8x32xf32>
    %1 = vector.shape_cast %0 : vector<1x8x32xf32> to vector<8x32xf32>
    %c0_2 = arith.constant 0 : index
    %c0_3 = arith.constant 0 : index
    %c0_4 = arith.constant 0 : index
    %2 = vector.load %arg2[%c0_2, %c0_3, %c0_4] : memref<1x1x8xf32, #tpu.memory_space<vmem>>, vector<1x1x8xf32>
    %3 = vector.shape_cast %2 : vector<1x1x8xf32> to vector<1x8xf32>
    %cst = arith.constant dense<0.000000e+00> : vector<8xf32>
    %4 = vector.multi_reduction <add>, %1, %cst [1] : vector<8x32xf32> to vector<8xf32>
    %5 = vector.shape_cast %4 : vector<8xf32> to vector<8x1xf32>
    %cst_5 = arith.constant 3.200000e+01 : f32
    %6 = vector.broadcast %cst_5 : f32 to vector<8x1xf32>
    %7 = arith.divf %5, %6 : vector<8x1xf32>
    %8 = vector.broadcast %7 : vector<8x1xf32> to vector<8x32xf32>
    %9 = arith.subf %1, %8 : vector<8x32xf32>
    %10 = arith.mulf %9, %9 : vector<8x32xf32>
    %cst_6 = arith.constant dense<0.000000e+00> : vector<8xf32>
    %11 = vector.multi_reduction <add>, %10, %cst_6 [1] : vector<8x32xf32> to vector<8xf32>
    %12 = vector.shape_cast %11 : vector<8xf32> to vector<8x1xf32>
    %cst_7 = arith.constant 3.200000e+01 : f32
    %13 = vector.broadcast %cst_7 : f32 to vector<8x1xf32>
    %14 = arith.divf %12, %13 : vector<8x1xf32>
    %15 = vector.broadcast %7 : vector<8x1xf32> to vector<8x32xf32>
    %16 = arith.subf %1, %15 : vector<8x32xf32>
    %cst_8 = arith.constant 9.99999997E-7 : f32
    %17 = vector.broadcast %cst_8 : f32 to vector<8x1xf32>
    %18 = arith.addf %14, %17 : vector<8x1xf32>
    %19 = math.rsqrt %18 : vector<8x1xf32>
    %20 = vector.broadcast %19 : vector<8x1xf32> to vector<8x32xf32>
    %21 = arith.mulf %16, %20 : vector<8x32xf32>
    %c0_9 = arith.constant 0 : index
    %c0_10 = arith.constant 0 : index
    %22 = vector.load %arg3[%c0_9, %c0_10] : memref<1x32xf32, #tpu.memory_space<vmem>>, vector<1x32xf32>
    %23 = vector.broadcast %22 : vector<1x32xf32> to vector<8x32xf32>
    %24 = arith.mulf %21, %23 : vector<8x32xf32>
    %c0_11 = arith.constant 0 : index
    %c0_12 = arith.constant 0 : index
    %25 = vector.load %arg4[%c0_11, %c0_12] : memref<1x32xf32, #tpu.memory_space<vmem>>, vector<1x32xf32>
    %26 = vector.broadcast %25 : vector<1x32xf32> to vector<8x32xf32>
    %27 = arith.addf %24, %26 : vector<8x32xf32>
    %28 = arith.truncf %27 : vector<8x32xf32> to vector<8x32xbf16>
    %c0_13 = arith.constant 0 : index
    %c0_14 = arith.constant 0 : index
    %29 = vector.load %arg5[%c0_13, %c0_14] : memref<32x96xbf16, #tpu.memory_space<vmem>>, vector<32x96xbf16>
    %cst_15 = arith.constant dense<0.000000e+00> : vector<8x96xf32>
    %30 = tpu.matmul %28, %29, %cst_15 {dimension_numbers = #tpu.dot_dimension_numbers<[1], [0], [0], [1], [0, 0, 1, 1], [], []>} : vector<8x32xbf16>, vector<32x96xbf16>, vector<8x96xf32> -> vector<8x96xf32>
    %c0_16 = arith.constant 0 : index
    %c0_17 = arith.constant 0 : index
    %31 = vector.load %arg6[%c0_16, %c0_17] : memref<1x96xf32, #tpu.memory_space<vmem>>, vector<1x96xf32>
    %32 = vector.broadcast %31 : vector<1x96xf32> to vector<8x96xf32>
    %33 = arith.addf %30, %32 : vector<8x96xf32>
    %34 = arith.truncf %33 : vector<8x96xf32> to vector<8x96xbf16>
    %35 = vector.shape_cast %3 : vector<1x8xf32> to vector<1x8xf32>
    %36 = vector.broadcast %35 : vector<1x8xf32> to vector<8x8xf32>
    %37 = vector.extract_strided_slice %34 {offsets = [0, 0], sizes = [8, 8], strides = [1, 1]} : vector<8x96xbf16> to vector<8x8xbf16>
    %38 = vector.extract_strided_slice %34 {offsets = [0, 32], sizes = [8, 8], strides = [1, 1]} : vector<8x96xbf16> to vector<8x8xbf16>
    %39 = vector.extract_strided_slice %34 {offsets = [0, 64], sizes = [8, 8], strides = [1, 1]} : vector<8x96xbf16> to vector<8x8xbf16>
    %cst_18 = arith.constant dense<0.000000e+00> : vector<8x8xf32>
    %40 = tpu.matmul %37, %38, %cst_18 {dimension_numbers = #tpu.dot_dimension_numbers<[1], [1], [0], [0], [0, 0, 1, 0], [], []>} : vector<8x8xbf16>, vector<8x8xbf16>, vector<8x8xf32> -> vector<8x8xf32>
    %41 = arith.addf %40, %36 : vector<8x8xf32>
    %cst_19 = arith.constant dense<0xFF800000> : vector<8xf32>
    %42 = vector.multi_reduction <maximumf>, %41, %cst_19 [1] : vector<8x8xf32> to vector<8xf32>
    %43 = vector.shape_cast %42 : vector<8xf32> to vector<8x1xf32>
    %44 = vector.broadcast %43 : vector<8x1xf32> to vector<8x8xf32>
    %45 = arith.subf %41, %44 : vector<8x8xf32>
    %46 = math.exp %45 : vector<8x8xf32>
    %cst_20 = arith.constant dense<0.000000e+00> : vector<8xf32>
    %47 = vector.multi_reduction <add>, %46, %cst_20 [1] : vector<8x8xf32> to vector<8xf32>
    %48 = vector.shape_cast %47 : vector<8xf32> to vector<8x1xf32>
    %49 = tpu.reciprocal %48 {approx = true} : vector<8x1xf32> -> vector<8x1xf32>
    %50 = arith.truncf %46 : vector<8x8xf32> to vector<8x8xbf16>
    %cst_21 = arith.constant dense<0.000000e+00> : vector<8x8xf32>
    %51 = tpu.matmul %50, %39, %cst_21 {dimension_numbers = #tpu.dot_dimension_numbers<[1], [0], [0], [1], [0, 0, 1, 1], [], []>} : vector<8x8xbf16>, vector<8x8xbf16>, vector<8x8xf32> -> vector<8x8xf32>
    %52 = vector.broadcast %49 : vector<8x1xf32> to vector<8x8xf32>
    %53 = arith.mulf %51, %52 : vector<8x8xf32>
    %c0_22 = arith.constant 0 : index
    %c0_23 = arith.constant 0 : index
    %54 = vector.load %arg16[%c0_22, %c0_23] : memref<8x32xf32, #tpu.memory_space<vmem>>, vector<8x8xf32>
    tpu.vector_store %arg16[%c0_22, %c0_23], %53 {strides = array<i32>} : memref<8x32xf32, #tpu.memory_space<vmem>>, vector<8x8xf32>,
    %55 = vector.extract_strided_slice %34 {offsets = [0, 8], sizes = [8, 8], strides = [1, 1]} : vector<8x96xbf16> to vector<8x8xbf16>
    %56 = vector.extract_strided_slice %34 {offsets = [0, 40], sizes = [8, 8], strides = [1, 1]} : vector<8x96xbf16> to vector<8x8xbf16>
    %57 = vector.extract_strided_slice %34 {offsets = [0, 72], sizes = [8, 8], strides = [1, 1]} : vector<8x96xbf16> to vector<8x8xbf16>
    %cst_24 = arith.constant dense<0.000000e+00> : vector<8x8xf32>
    %58 = tpu.matmul %55, %56, %cst_24 {dimension_numbers = #tpu.dot_dimension_numbers<[1], [1], [0], [0], [0, 0, 1, 0], [], []>} : vector<8x8xbf16>, vector<8x8xbf16>, vector<8x8xf32> -> vector<8x8xf32>
    %59 = arith.addf %58, %36 : vector<8x8xf32>
    %cst_25 = arith.constant dense<0xFF800000> : vector<8xf32>
    %60 = vector.multi_reduction <maximumf>, %59, %cst_25 [1] : vector<8x8xf32> to vector<8xf32>
    %61 = vector.shape_cast %60 : vector<8xf32> to vector<8x1xf32>
    %62 = vector.broadcast %61 : vector<8x1xf32> to vector<8x8xf32>
    %63 = arith.subf %59, %62 : vector<8x8xf32>
    %64 = math.exp %63 : vector<8x8xf32>
    %cst_26 = arith.constant dense<0.000000e+00> : vector<8xf32>
    %65 = vector.multi_reduction <add>, %64, %cst_26 [1] : vector<8x8xf32> to vector<8xf32>
    %66 = vector.shape_cast %65 : vector<8xf32> to vector<8x1xf32>
    %67 = tpu.reciprocal %66 {approx = true} : vector<8x1xf32> -> vector<8x1xf32>
    %68 = arith.truncf %64 : vector<8x8xf32> to vector<8x8xbf16>
    %cst_27 = arith.constant dense<0.000000e+00> : vector<8x8xf32>
    %69 = tpu.matmul %68, %57, %cst_27 {dimension_numbers = #tpu.dot_dimension_numbers<[1], [0], [0], [1], [0, 0, 1, 1], [], []>} : vector<8x8xbf16>, vector<8x8xbf16>, vector<8x8xf32> -> vector<8x8xf32>
    %70 = vector.broadcast %67 : vector<8x1xf32> to vector<8x8xf32>
    %71 = arith.mulf %69, %70 : vector<8x8xf32>
    %c0_28 = arith.constant 0 : index
    %c8 = arith.constant 8 : index
    %72 = vector.load %arg16[%c0_28, %c8] : memref<8x32xf32, #tpu.memory_space<vmem>>, vector<8x8xf32>
    tpu.vector_store %arg16[%c0_28, %c8], %71 {strides = array<i32>} : memref<8x32xf32, #tpu.memory_space<vmem>>, vector<8x8xf32>,
    %73 = vector.extract_strided_slice %34 {offsets = [0, 16], sizes = [8, 8], strides = [1, 1]} : vector<8x96xbf16> to vector<8x8xbf16>
    %74 = vector.extract_strided_slice %34 {offsets = [0, 48], sizes = [8, 8], strides = [1, 1]} : vector<8x96xbf16> to vector<8x8xbf16>
    %75 = vector.extract_strided_slice %34 {offsets = [0, 80], sizes = [8, 8], strides = [1, 1]} : vector<8x96xbf16> to vector<8x8xbf16>
    %cst_29 = arith.constant dense<0.000000e+00> : vector<8x8xf32>
    %76 = tpu.matmul %73, %74, %cst_29 {dimension_numbers = #tpu.dot_dimension_numbers<[1], [1], [0], [0], [0, 0, 1, 0], [], []>} : vector<8x8xbf16>, vector<8x8xbf16>, vector<8x8xf32> -> vector<8x8xf32>
    %77 = arith.addf %76, %36 : vector<8x8xf32>
    %cst_30 = arith.constant dense<0xFF800000> : vector<8xf32>
    %78 = vector.multi_reduction <maximumf>, %77, %cst_30 [1] : vector<8x8xf32> to vector<8xf32>
    %79 = vector.shape_cast %78 : vector<8xf32> to vector<8x1xf32>
    %80 = vector.broadcast %79 : vector<8x1xf32> to vector<8x8xf32>
    %81 = arith.subf %77, %80 : vector<8x8xf32>
    %82 = math.exp %81 : vector<8x8xf32>
    %cst_31 = arith.constant dense<0.000000e+00> : vector<8xf32>
    %83 = vector.multi_reduction <add>, %82, %cst_31 [1] : vector<8x8xf32> to vector<8xf32>
    %84 = vector.shape_cast %83 : vector<8xf32> to vector<8x1xf32>
    %85 = tpu.reciprocal %84 {approx = true} : vector<8x1xf32> -> vector<8x1xf32>
    %86 = arith.truncf %82 : vector<8x8xf32> to vector<8x8xbf16>
    %cst_32 = arith.constant dense<0.000000e+00> : vector<8x8xf32>
    %87 = tpu.matmul %86, %75, %cst_32 {dimension_numbers = #tpu.dot_dimension_numbers<[1], [0], [0], [1], [0, 0, 1, 1], [], []>} : vector<8x8xbf16>, vector<8x8xbf16>, vector<8x8xf32> -> vector<8x8xf32>
    %88 = vector.broadcast %85 : vector<8x1xf32> to vector<8x8xf32>
    %89 = arith.mulf %87, %88 : vector<8x8xf32>
    %c0_33 = arith.constant 0 : index
    %c16 = arith.constant 16 : index
    %90 = vector.load %arg16[%c0_33, %c16] : memref<8x32xf32, #tpu.memory_space<vmem>>, vector<8x8xf32>
    tpu.vector_store %arg16[%c0_33, %c16], %89 {strides = array<i32>} : memref<8x32xf32, #tpu.memory_space<vmem>>, vector<8x8xf32>,
    %91 = vector.extract_strided_slice %34 {offsets = [0, 24], sizes = [8, 8], strides = [1, 1]} : vector<8x96xbf16> to vector<8x8xbf16>
    %92 = vector.extract_strided_slice %34 {offsets = [0, 56], sizes = [8, 8], strides = [1, 1]} : vector<8x96xbf16> to vector<8x8xbf16>
    %93 = vector.extract_strided_slice %34 {offsets = [0, 88], sizes = [8, 8], strides = [1, 1]} : vector<8x96xbf16> to vector<8x8xbf16>
    %cst_34 = arith.constant dense<0.000000e+00> : vector<8x8xf32>
    %94 = tpu.matmul %91, %92, %cst_34 {dimension_numbers = #tpu.dot_dimension_numbers<[1], [1], [0], [0], [0, 0, 1, 0], [], []>} : vector<8x8xbf16>, vector<8x8xbf16>, vector<8x8xf32> -> vector<8x8xf32>
    %95 = arith.addf %94, %36 : vector<8x8xf32>
    %cst_35 = arith.constant dense<0xFF800000> : vector<8xf32>
    %96 = vector.multi_reduction <maximumf>, %95, %cst_35 [1] : vector<8x8xf32> to vector<8xf32>
    %97 = vector.shape_cast %96 : vector<8xf32> to vector<8x1xf32>
    %98 = vector.broadcast %97 : vector<8x1xf32> to vector<8x8xf32>
    %99 = arith.subf %95, %98 : vector<8x8xf32>
    %100 = math.exp %99 : vector<8x8xf32>
    %cst_36 = arith.constant dense<0.000000e+00> : vector<8xf32>
    %101 = vector.multi_reduction <add>, %100, %cst_36 [1] : vector<8x8xf32> to vector<8xf32>
    %102 = vector.shape_cast %101 : vector<8xf32> to vector<8x1xf32>
    %103 = tpu.reciprocal %102 {approx = true} : vector<8x1xf32> -> vector<8x1xf32>
    %104 = arith.truncf %100 : vector<8x8xf32> to vector<8x8xbf16>
    %cst_37 = arith.constant dense<0.000000e+00> : vector<8x8xf32>
    %105 = tpu.matmul %104, %93, %cst_37 {dimension_numbers = #tpu.dot_dimension_numbers<[1], [0], [0], [1], [0, 0, 1, 1], [], []>} : vector<8x8xbf16>, vector<8x8xbf16>, vector<8x8xf32> -> vector<8x8xf32>
    %106 = vector.broadcast %103 : vector<8x1xf32> to vector<8x8xf32>
    %107 = arith.mulf %105, %106 : vector<8x8xf32>
    %c0_38 = arith.constant 0 : index
    %c24 = arith.constant 24 : index
    %108 = vector.load %arg16[%c0_38, %c24] : memref<8x32xf32, #tpu.memory_space<vmem>>, vector<8x8xf32>
    tpu.vector_store %arg16[%c0_38, %c24], %107 {strides = array<i32>} : memref<8x32xf32, #tpu.memory_space<vmem>>, vector<8x8xf32>,
    %c0_39 = arith.constant 0 : index
    %c0_40 = arith.constant 0 : index
    %109 = vector.load %arg16[%c0_39, %c0_40] : memref<8x32xf32, #tpu.memory_space<vmem>>, vector<8x32xf32>
    %110 = arith.truncf %109 : vector<8x32xf32> to vector<8x32xbf16>
    %c0_41 = arith.constant 0 : index
    %c0_42 = arith.constant 0 : index
    %111 = vector.load %arg7[%c0_41, %c0_42] : memref<32x32xbf16, #tpu.memory_space<vmem>>, vector<32x32xbf16>
    %cst_43 = arith.constant dense<0.000000e+00> : vector<8x32xf32>
    %112 = tpu.matmul %110, %111, %cst_43 {dimension_numbers = #tpu.dot_dimension_numbers<[1], [0], [0], [1], [0, 0, 1, 1], [], []>} : vector<8x32xbf16>, vector<32x32xbf16>, vector<8x32xf32> -> vector<8x32xf32>
    %c0_44 = arith.constant 0 : index
    %c0_45 = arith.constant 0 : index
    %113 = vector.load %arg8[%c0_44, %c0_45] : memref<1x32xf32, #tpu.memory_space<vmem>>, vector<1x32xf32>
    %114 = vector.broadcast %113 : vector<1x32xf32> to vector<8x32xf32>
    %115 = arith.addf %112, %114 : vector<8x32xf32>
    %116 = arith.addf %115, %1 : vector<8x32xf32>
    %cst_46 = arith.constant dense<0.000000e+00> : vector<8xf32>
    %117 = vector.multi_reduction <add>, %116, %cst_46 [1] : vector<8x32xf32> to vector<8xf32>
    %118 = vector.shape_cast %117 : vector<8xf32> to vector<8x1xf32>
    %cst_47 = arith.constant 3.200000e+01 : f32
    %119 = vector.broadcast %cst_47 : f32 to vector<8x1xf32>
    %120 = arith.divf %118, %119 : vector<8x1xf32>
    %121 = vector.broadcast %120 : vector<8x1xf32> to vector<8x32xf32>
    %122 = arith.subf %116, %121 : vector<8x32xf32>
    %123 = arith.mulf %122, %122 : vector<8x32xf32>
    %cst_48 = arith.constant dense<0.000000e+00> : vector<8xf32>
    %124 = vector.multi_reduction <add>, %123, %cst_48 [1] : vector<8x32xf32> to vector<8xf32>
    %125 = vector.shape_cast %124 : vector<8xf32> to vector<8x1xf32>
    %cst_49 = arith.constant 3.200000e+01 : f32
    %126 = vector.broadcast %cst_49 : f32 to vector<8x1xf32>
    %127 = arith.divf %125, %126 : vector<8x1xf32>
    %128 = vector.broadcast %120 : vector<8x1xf32> to vector<8x32xf32>
    %129 = arith.subf %116, %128 : vector<8x32xf32>
    %cst_50 = arith.constant 9.99999997E-7 : f32
    %130 = vector.broadcast %cst_50 : f32 to vector<8x1xf32>
    %131 = arith.addf %127, %130 : vector<8x1xf32>
    %132 = math.rsqrt %131 : vector<8x1xf32>
    %133 = vector.broadcast %132 : vector<8x1xf32> to vector<8x32xf32>
    %134 = arith.mulf %129, %133 : vector<8x32xf32>
    %c0_51 = arith.constant 0 : index
    %c0_52 = arith.constant 0 : index
    %135 = vector.load %arg9[%c0_51, %c0_52] : memref<1x32xf32, #tpu.memory_space<vmem>>, vector<1x32xf32>
    %136 = vector.broadcast %135 : vector<1x32xf32> to vector<8x32xf32>
    %137 = arith.mulf %134, %136 : vector<8x32xf32>
    %c0_53 = arith.constant 0 : index
    %c0_54 = arith.constant 0 : index
    %138 = vector.load %arg10[%c0_53, %c0_54] : memref<1x32xf32, #tpu.memory_space<vmem>>, vector<1x32xf32>
    %139 = vector.broadcast %138 : vector<1x32xf32> to vector<8x32xf32>
    %140 = arith.addf %137, %139 : vector<8x32xf32>
    %141 = arith.truncf %140 : vector<8x32xf32> to vector<8x32xbf16>
    %c0_55 = arith.constant 0 : index
    %c0_56 = arith.constant 0 : index
    %142 = vector.load %arg11[%c0_55, %c0_56] : memref<32x64xbf16, #tpu.memory_space<vmem>>, vector<32x64xbf16>
    %cst_57 = arith.constant dense<0.000000e+00> : vector<8x64xf32>
    %143 = tpu.matmul %141, %142, %cst_57 {dimension_numbers = #tpu.dot_dimension_numbers<[1], [0], [0], [1], [0, 0, 1, 1], [], []>} : vector<8x32xbf16>, vector<32x64xbf16>, vector<8x64xf32> -> vector<8x64xf32>
    %c0_58 = arith.constant 0 : index
    %c0_59 = arith.constant 0 : index
    %144 = vector.load %arg12[%c0_58, %c0_59] : memref<1x64xf32, #tpu.memory_space<vmem>>, vector<1x64xf32>
    %145 = vector.broadcast %144 : vector<1x64xf32> to vector<8x64xf32>
    %146 = arith.addf %143, %145 : vector<8x64xf32>
    %cst_60 = arith.constant 0.000000e+00 : f32
    %147 = vector.broadcast %cst_60 : f32 to vector<8x64xf32>
    %148 = arith.maximumf %146, %147 : vector<8x64xf32>
    %149 = arith.truncf %148 : vector<8x64xf32> to vector<8x64xbf16>
    %c0_61 = arith.constant 0 : index
    %c0_62 = arith.constant 0 : index
    %150 = vector.load %arg13[%c0_61, %c0_62] : memref<64x32xbf16, #tpu.memory_space<vmem>>, vector<64x32xbf16>
    %cst_63 = arith.constant dense<0.000000e+00> : vector<8x32xf32>
    %151 = tpu.matmul %149, %150, %cst_63 {dimension_numbers = #tpu.dot_dimension_numbers<[1], [0], [0], [1], [0, 0, 1, 1], [], []>} : vector<8x64xbf16>, vector<64x32xbf16>, vector<8x32xf32> -> vector<8x32xf32>
    %c0_64 = arith.constant 0 : index
    %c0_65 = arith.constant 0 : index
    %152 = vector.load %arg14[%c0_64, %c0_65] : memref<1x32xf32, #tpu.memory_space<vmem>>, vector<1x32xf32>
    %153 = vector.broadcast %152 : vector<1x32xf32> to vector<8x32xf32>
    %154 = arith.addf %151, %153 : vector<8x32xf32>
    %155 = arith.addf %154, %116 : vector<8x32xf32>
    %c0_66 = arith.constant 0 : index
    %c0_67 = arith.constant 0 : index
    %c0_68 = arith.constant 0 : index
    %156 = vector.load %arg15[%c0_66, %c0_67, %c0_68] : memref<1x8x32xf32, #tpu.memory_space<vmem>>, vector<1x8x32xf32>
    %157 = vector.shape_cast %156 : vector<1x8x32xf32> to vector<8x32xf32>
    %158 = vector.shape_cast %155 : vector<8x32xf32> to vector<1x8x32xf32>
    tpu.vector_store %arg15[%c0_66, %c0_67, %c0_68], %158 {strides = array<i32>} : memref<1x8x32xf32, #tpu.memory_space<vmem>>, vector<1x8x32xf32>,
    return
  }
  func.func @transform_0(%arg0: i32) -> (i32, i32, i32) {
    %c0_i32 = arith.constant 0 : i32
    %c0_i32_0 = arith.constant 0 : i32
    %c0_i32_1 = arith.constant 0 : i32
    return %arg0, %c0_i32, %c0_i32_0 : i32, i32, i32
  }
  func.func @transform_1(%arg0: i32) -> (i32, i32, i32) {
    %c0_i32 = arith.constant 0 : i32
    %c0_i32_0 = arith.constant 0 : i32
    %c0_i32_1 = arith.constant 0 : i32
    return %arg0, %c0_i32, %c0_i32_0 : i32, i32, i32
  }
  func.func @transform_2(%arg0: i32) -> (i32, i32) {
    %c0_i32 = arith.constant 0 : i32
    %c0_i32_0 = arith.constant 0 : i32
    %c0_i32_1 = arith.constant 0 : i32
    return %c0_i32, %c0_i32_0 : i32, i32
  }
  func.func @transform_3(%arg0: i32) -> (i32, i32) {
    %c0_i32 = arith.constant 0 : i32
    %c0_i32_0 = arith.constant 0 : i32
    %c0_i32_1 = arith.constant 0 : i32
    return %c0_i32, %c0_i32_0 : i32, i32
  }
  func.func @transform_4(%arg0: i32) -> (i32, i32) {
    %c0_i32 = arith.constant 0 : i32
    %c0_i32_0 = arith.constant 0 : i32
    %c0_i32_1 = arith.constant 0 : i32
    return %c0_i32, %c0_i32_0 : i32, i32
  }
  func.func @transform_5(%arg0: i32) -> (i32, i32) {
    %c0_i32 = arith.constant 0 : i32
    %c0_i32_0 = arith.constant 0 : i32
    %c0_i32_1 = arith.constant 0 : i32
    return %c0_i32, %c0_i32_0 : i32, i32
  }
  func.func @transform_6(%arg0: i32) -> (i32, i32) {
    %c0_i32 = arith.constant 0 : i32
    %c0_i32_0 = arith.constant 0 : i32
    %c0_i32_1 = arith.constant 0 : i32
    return %c0_i32, %c0_i32_0 : i32, i32
  }
  func.func @transform_7(%arg0: i32) -> (i32, i32) {
    %c0_i32 = arith.constant 0 : i32
    %c0_i32_0 = arith.constant 0 : i32
    %c0_i32_1 = arith.constant 0 : i32
    return %c0_i32, %c0_i32_0 : i32, i32
  }
  func.func @transform_8(%arg0: i32) -> (i32, i32) {
    %c0_i32 = arith.constant 0 : i32
    %c0_i32_0 = arith.constant 0 : i32
    %c0_i32_1 = arith.constant 0 : i32
    return %c0_i32, %c0_i32_0 : i32, i32
  }
  func.func @transform_9(%arg0: i32) -> (i32, i32) {
    %c0_i32 = arith.constant 0 : i32
    %c0_i32_0 = arith.constant 0 : i32
    %c0_i32_1 = arith.constant 0 : i32
    return %c0_i32, %c0_i32_0 : i32, i32
  }
  func.func @transform_10(%arg0: i32) -> (i32, i32) {
    %c0_i32 = arith.constant 0 : i32
    %c0_i32_0 = arith.constant 0 : i32
    %c0_i32_1 = arith.constant 0 : i32
    return %c0_i32, %c0_i32_0 : i32, i32
  }
  func.func @transform_11(%arg0: i32) -> (i32, i32) {
    %c0_i32 = arith.constant 0 : i32
    %c0_i32_0 = arith.constant 0 : i32
    %c0_i32_1 = arith.constant 0 : i32
    return %c0_i32, %c0_i32_0 : i32, i32
  }
  func.func @transform_12(%arg0: i32) -> (i32, i32) {
    %c0_i32 = arith.constant 0 : i32
    %c0_i32_0 = arith.constant 0 : i32
    %c0_i32_1 = arith.constant 0 : i32
    return %c0_i32, %c0_i32_0 : i32, i32
  }
  func.func @transform_13(%arg0: i32) -> (i32, i32) {
    %c0_i32 = arith.constant 0 : i32
    %c0_i32_0 = arith.constant 0 : i32
    %c0_i32_1 = arith.constant 0 : i32
    return %c0_i32, %c0_i32_0 : i32, i32
  }
  func.func @transform_14(%arg0: i32) -> (i32, i32, i32) {
    %c0_i32 = arith.constant 0 : i32
    %c0_i32_0 = arith.constant 0 : i32
    %c0_i32_1 = arith.constant 0 : i32
    return %arg0, %c0_i32, %c0_i32_0 : i32, i32, i32
  }
}

</mosaic_0001>

<llo_original>
// kernel: tpu_custom_call.1
$region0: #{tpu_custom_call.1}
  #allocation0 [shape = 'u32[]', space=smem, size = 0x4, offset = 0x4, fixed_abs, tag = 'smem constant byte address 0x4 - core index']
  #allocation1 [shape = 'u32[144,128]{1,0:T(1,128)}', space=vmem, size = 0x12000, scoped, tag = 'internal scratch']
  #allocation2 [shape = 'f32[8,32]{1,0:T(8,128)}', space=vmem, size = 0x1000, scoped, tag = 'scratch operand']
  %s0 = inlined_call_operand.vmem [shape: f32[2,8,32], index: 0, kind: input, shape index: {}]
  %s1 = inlined_call_operand.hbm [shape: f32[2,1,8], index: 1, kind: input, shape index: {}]
  %s2 = inlined_call_operand.hbm [shape: f32[1,32], index: 2, kind: input, shape index: {}]
  %s3 = inlined_call_operand.hbm [shape: f32[1,32], index: 3, kind: input, shape index: {}]
  %s4 = inlined_call_operand.vmem [shape: bf16[32,96], index: 4, kind: input, shape index: {}]
  %s5 = inlined_call_operand.hbm [shape: f32[1,96], index: 5, kind: input, shape index: {}]
  %s6 = inlined_call_operand.vmem [shape: bf16[32,32], index: 6, kind: input, shape index: {}]
  %s7 = inlined_call_operand.hbm [shape: f32[1,32], index: 7, kind: input, shape index: {}]
  %s8 = inlined_call_operand.hbm [shape: f32[1,32], index: 8, kind: input, shape index: {}]
  %s9 = inlined_call_operand.hbm [shape: f32[1,32], index: 9, kind: input, shape index: {}]
  %s10 = inlined_call_operand.vmem [shape: bf16[32,64], index: 10, kind: input, shape index: {}]
  %s11 = inlined_call_operand.vmem [shape: f32[1,64], index: 11, kind: input, shape index: {}]
  %s12 = inlined_call_operand.vmem [shape: bf16[64,32], index: 12, kind: input, shape index: {}]
  %s13 = inlined_call_operand.vmem [shape: f32[1,32], index: 13, kind: input, shape index: {}]
  %s14 = inlined_call_operand.hbm [shape: f32[2,8,32], index: 14, kind: output, shape index: {}]
  %s15 = sld [smem:[#allocation0]]
  $region117: #{tpu_custom_call.1} parent=0
    _
  %s17 = ssub.s32 1, %s15
  %s18 = scalar_select 0, %s17, %s15
  $region1: #{tpu_custom_call.1} parent=0
    #allocation3 [shape = 'u8[1024]{0}', space=vmem, size = 0x400, scoped, tag = 'input window, operand 1']
    #allocation4 [shape = 's32[2]{0}', space=sflag, size = 0x8, scoped, tag = 'scoped memory for tpu_custom_call.1']
    #allocation5 [shape = 's32[2]{0}', space=sflag, size = 0x8, scoped, tag = 'scoped memory for tpu_custom_call.1']
    #allocation6 [shape = 'u8[512]{0}', space=vmem, size = 0x400, scoped, tag = 'input window, operand 2, single buffered']
    #allocation7 [shape = 's32[1]{0}', space=sflag, size = 0x4, scoped, tag = 'scoped memory for tpu_custom_call.1']
    #allocation8 [shape = 'u8[512]{0}', space=vmem, size = 0x400, scoped, tag = 'input window, operand 3, single buffered']
    #allocation9 [shape = 'u8[512]{0}', space=vmem, size = 0x400, scoped, tag = 'input window, operand 5, single buffered']
    #allocation10 [shape = 's32[1]{0}', space=sflag, size = 0x4, scoped, tag = 'scoped memory for tpu_custom_call.1']
    #allocation11 [shape = 'u8[512]{0}', space=vmem, size = 0x400, scoped, tag = 'input window, operand 7, single buffered']
    #allocation12 [shape = 'u8[512]{0}', space=vmem, size = 0x400, scoped, tag = 'input window, operand 8, single buffered']
    #allocation13 [shape = 's32[1]{0}', space=sflag, size = 0x4, scoped, tag = 'scoped memory for tpu_custom_call.1']
    #allocation14 [shape = 'u8[512]{0}', space=vmem, size = 0x400, scoped, tag = 'input window, operand 9, single buffered']
    #allocation15 [shape = 'u8[8192]{0}', space=vmem, size = 0x2000, scoped, tag = 'output window, operand 0']
    %19 = vsyncpa [#allocation4], 0
    %s20 = scalar_lea.sflag [#allocation4], 1
    %21 = vsyncpa %s20, 0
    %22 = vsyncpa [#allocation7], 0
    %23 = vsyncpa [#allocation10], 0
    %24 = vsyncpa [#allocation13], 0
    %25 = vsyncpa [#allocation5], 0
    %s26 = scalar_lea.sflag [#allocation5], 1
    %27 = vsyncpa %s26, 0
    loop: start=0, step=1, limit=4
    $region2: #{tpu_custom_call.1} parent=1 // loop_pre_header
      _
    $region3: #{tpu_custom_call.1} parent=1 // loop_header
      %s29 = sphi 0, %s33
      %p30 = scmp.ge.s32.totalorder %s29, 4
      %s39 = sphi 0, %s41
      %s42 = sphi 0, %s39
      %s43 = sphi 0, %s42
      %s59 = sphi 0, %s43
      %s65 = sphi 0, %s67
      %s68 = sphi 0, %s65
      %s69 = sphi 0, %s68
      %s85 = sphi 0, %s69
      %s89 = sphi 0, %s89
      %s91 = sphi 0, %s89
      %s92 = sphi 0, %s91
      %s106 = sphi 0, %s92
      %s110 = sphi 0, %s110
      %s112 = sphi 0, %s110
      %s113 = sphi 0, %s112
      %s127 = sphi 0, %s113
      %s131 = sphi 0, %s131
      %s133 = sphi 0, %s131
      %s134 = sphi 0, %s133
      %s148 = sphi 0, %s134
      %s152 = sphi 0, %s152
      %s154 = sphi 0, %s152
      %s155 = sphi 0, %s154
      %s169 = sphi 0, %s155
      %s173 = sphi 0, %s173
      %s175 = sphi 0, %s173
      %s176 = sphi 0, %s175
      %s190 = sphi 0, %s176
      %s194 = sphi 0, %s194
      %s196 = sphi 0, %s194
      %s197 = sphi 0, %s196
      %s211 = sphi 0, %s197
      %s215 = sphi 0, %s215
      %s217 = sphi 0, %s215
      %s218 = sphi 0, %s217
      %s232 = sphi 0, %s218
      %s236 = sphi 0, %s236
      %s238 = sphi 0, %s236
      %s239 = sphi 0, %s238
      %s253 = sphi 0, %s239
      %s257 = sphi 0, %s257
      %s259 = sphi 0, %s257
      %s260 = sphi 0, %s259
      %s274 = sphi 0, %s260
      %s278 = sphi 0, %s278
      %s280 = sphi 0, %s278
      %s281 = sphi 0, %s280
      %s295 = sphi 0, %s281
      %s299 = sphi 0, %s299
      %s301 = sphi 0, %s299
      %s302 = sphi 0, %s301
      %s316 = sphi 0, %s302
      %s320 = sphi 0, %s320
      %s322 = sphi 0, %s320
      %s323 = sphi 0, %s322
      %s337 = sphi 0, %s323
      %s343 = sphi 0, %s345
      %s346 = sphi 0, %s343
      %s347 = sphi 0, %s346
      %s363 = sphi 0, %s347
    $region4: #{tpu_custom_call.1} parent=1 // loop_header_branch
      %32 = sbr.rel (%p30) target = $region8
    $region5: #{tpu_custom_call.1} parent=1 // loop_body
      %s34 = ssub.s32 %s29, 1
      %s35 = ssub.s32 %s29, 2
      %s36 = sadd.s32 %s29, 1
      %s37 = ssub.s32 %s29, %s36
      %p38 = scmp.eq.s32.totalorder %s37, 0
      %s40 = sadd.s32 %s39, 1
      %s41 = scalar_select %p38, %s39, %s40
      %p44 = pneg %p38
      %p45 = scmp.eq.s32.totalorder %s29, 1
      %p46 = por %p44, %p45
      %p47 = scmp.ne.s32.totalorder %s39, %s42
      %p48 = scmp.eq.s32.totalorder %s29, 0
      %p49 = por %p47, %p48
      %p50 = scmp.ne.s32.totalorder %s39, %s42
      %p51 = scmp.eq.s32.totalorder %s34, 1
      %p52 = por %p50, %p51
      %p53 = scmp.ne.s32.totalorder %s42, %s43
      %p54 = scmp.eq.s32.totalorder %s34, 0
      %p55 = por %p53, %p54
      %p56 = scmp.ne.s32.totalorder %s42, %s43
      %p57 = scmp.eq.s32.totalorder %s35, 1
      %p58 = por %p56, %p57
      %p60 = scmp.ne.s32.totalorder %s43, %s59
      %p61 = scmp.eq.s32.totalorder %s35, 0
      %p62 = por %p60, %p61
      %s63 = ssub.s32 %s29, %s36
      %p64 = scmp.eq.s32.totalorder %s63, 0
      %s66 = sadd.s32 %s65, 1
      %s67 = scalar_select %p64, %s65, %s66
      %p70 = pneg %p64
      %p71 = scmp.eq.s32.totalorder %s29, 1
      %p72 = por %p70, %p71
      %p73 = scmp.ne.s32.totalorder %s65, %s68
      %p74 = scmp.eq.s32.totalorder %s29, 0
      %p75 = por %p73, %p74
      %p76 = scmp.ne.s32.totalorder %s65, %s68
      %p77 = scmp.eq.s32.totalorder %s34, 1
      %p78 = por %p76, %p77
      %p79 = scmp.ne.s32.totalorder %s68, %s69
      %p80 = scmp.eq.s32.totalorder %s34, 0
      %p81 = por %p79, %p80
      %p82 = scmp.ne.s32.totalorder %s68, %s69
      %p83 = scmp.eq.s32.totalorder %s35, 1
      %p84 = por %p82, %p83
      %p86 = scmp.ne.s32.totalorder %s69, %s85
      %p87 = scmp.eq.s32.totalorder %s35, 0
      %p88 = por %p86, %p87
      %s90 = sadd.s32 %s89, 1
      %p93 = scmp.eq.s32.totalorder %s29, 1
      %p94 = scmp.ne.s32.totalorder %s89, %s91
      %p95 = scmp.eq.s32.totalorder %s29, 0
      %p96 = por %p94, %p95
      %p97 = scmp.ne.s32.totalorder %s89, %s91
      %p98 = scmp.eq.s32.totalorder %s34, 1
      %p99 = por %p97, %p98
      %p100 = scmp.ne.s32.totalorder %s91, %s92
      %p101 = scmp.eq.s32.totalorder %s34, 0
      %p102 = por %p100, %p101
      %p103 = scmp.ne.s32.totalorder %s91, %s92
      %p104 = scmp.eq.s32.totalorder %s35, 1
      %p105 = por %p103, %p104
      %p107 = scmp.ne.s32.totalorder %s92, %s106
      %p108 = scmp.eq.s32.totalorder %s35, 0
      %p109 = por %p107, %p108
      %s111 = sadd.s32 %s110, 1
      %p114 = scmp.eq.s32.totalorder %s29, 1
      %p115 = scmp.ne.s32.totalorder %s110, %s112
      %p116 = scmp.eq.s32.totalorder %s29, 0
      %p117 = por %p115, %p116
      %p118 = scmp.ne.s32.totalorder %s110, %s112
      %p119 = scmp.eq.s32.totalorder %s34, 1
      %p120 = por %p118, %p119
      %p121 = scmp.ne.s32.totalorder %s112, %s113
      %p122 = scmp.eq.s32.totalorder %s34, 0
      %p123 = por %p121, %p122
      %p124 = scmp.ne.s32.totalorder %s112, %s113
      %p125 = scmp.eq.s32.totalorder %s35, 1
      %p126 = por %p124, %p125
      %p128 = scmp.ne.s32.totalorder %s113, %s127
      %p129 = scmp.eq.s32.totalorder %s35, 0
      %p130 = por %p128, %p129
      %s132 = sadd.s32 %s131, 1
      %p135 = scmp.eq.s32.totalorder %s29, 1
      %p136 = scmp.ne.s32.totalorder %s131, %s133
      %p137 = scmp.eq.s32.totalorder %s29, 0
      %p138 = por %p136, %p137
      %p139 = scmp.ne.s32.totalorder %s131, %s133
      %p140 = scmp.eq.s32.totalorder %s34, 1
      %p141 = por %p139, %p140
      %p142 = scmp.ne.s32.totalorder %s133, %s134
      %p143 = scmp.eq.s32.totalorder %s34, 0
      %p144 = por %p142, %p143
      %p145 = scmp.ne.s32.totalorder %s133, %s134
      %p146 = scmp.eq.s32.totalorder %s35, 1
      %p147 = por %p145, %p146
      %p149 = scmp.ne.s32.totalorder %s134, %s148
      %p150 = scmp.eq.s32.totalorder %s35, 0
      %p151 = por %p149, %p150
      %s153 = sadd.s32 %s152, 1
      %p156 = scmp.eq.s32.totalorder %s29, 1
      %p157 = scmp.ne.s32.totalorder %s152, %s154
      %p158 = scmp.eq.s32.totalorder %s29, 0
      %p159 = por %p157, %p158
      %p160 = scmp.ne.s32.totalorder %s152, %s154
      %p161 = scmp.eq.s32.totalorder %s34, 1
      %p162 = por %p160, %p161
      %p163 = scmp.ne.s32.totalorder %s154, %s155
      %p164 = scmp.eq.s32.totalorder %s34, 0
      %p165 = por %p163, %p164
      %p166 = scmp.ne.s32.totalorder %s154, %s155
      %p167 = scmp.eq.s32.totalorder %s35, 1
      %p168 = por %p166, %p167
      %p170 = scmp.ne.s32.totalorder %s155, %s169
      %p171 = scmp.eq.s32.totalorder %s35, 0
      %p172 = por %p170, %p171
      %s174 = sadd.s32 %s173, 1
      %p177 = scmp.eq.s32.totalorder %s29, 1
      %p178 = scmp.ne.s32.totalorder %s173, %s175
      %p179 = scmp.eq.s32.totalorder %s29, 0
      %p180 = por %p178, %p179
      %p181 = scmp.ne.s32.totalorder %s173, %s175
      %p182 = scmp.eq.s32.totalorder %s34, 1
      %p183 = por %p181, %p182
      %p184 = scmp.ne.s32.totalorder %s175, %s176
      %p185 = scmp.eq.s32.totalorder %s34, 0
      %p186 = por %p184, %p185
      %p187 = scmp.ne.s32.totalorder %s175, %s176
      %p188 = scmp.eq.s32.totalorder %s35, 1
      %p189 = por %p187, %p188
      %p191 = scmp.ne.s32.totalorder %s176, %s190
      %p192 = scmp.eq.s32.totalorder %s35, 0
      %p193 = por %p191, %p192
      %s195 = sadd.s32 %s194, 1
      %p198 = scmp.eq.s32.totalorder %s29, 1
      %p199 = scmp.ne.s32.totalorder %s194, %s196
      %p200 = scmp.eq.s32.totalorder %s29, 0
      %p201 = por %p199, %p200
      %p202 = scmp.ne.s32.totalorder %s194, %s196
      %p203 = scmp.eq.s32.totalorder %s34, 1
      %p204 = por %p202, %p203
      %p205 = scmp.ne.s32.totalorder %s196, %s197
      %p206 = scmp.eq.s32.totalorder %s34, 0
      %p207 = por %p205, %p206
      %p208 = scmp.ne.s32.totalorder %s196, %s197
      %p209 = scmp.eq.s32.totalorder %s35, 1
      %p210 = por %p208, %p209
      %p212 = scmp.ne.s32.totalorder %s197, %s211
      %p213 = scmp.eq.s32.totalorder %s35, 0
      %p214 = por %p212, %p213
      %s216 = sadd.s32 %s215, 1
      %p219 = scmp.eq.s32.totalorder %s29, 1
      %p220 = scmp.ne.s32.totalorder %s215, %s217
      %p221 = scmp.eq.s32.totalorder %s29, 0
      %p222 = por %p220, %p221
      %p223 = scmp.ne.s32.totalorder %s215, %s217
      %p224 = scmp.eq.s32.totalorder %s34, 1
      %p225 = por %p223, %p224
      %p226 = scmp.ne.s32.totalorder %s217, %s218
      %p227 = scmp.eq.s32.totalorder %s34, 0
      %p228 = por %p226, %p227
      %p229 = scmp.ne.s32.totalorder %s217, %s218
      %p230 = scmp.eq.s32.totalorder %s35, 1
      %p231 = por %p229, %p230
      %p233 = scmp.ne.s32.totalorder %s218, %s232
      %p234 = scmp.eq.s32.totalorder %s35, 0
      %p235 = por %p233, %p234
      %s237 = sadd.s32 %s236, 1
      %p240 = scmp.eq.s32.totalorder %s29, 1
      %p241 = scmp.ne.s32.totalorder %s236, %s238
      %p242 = scmp.eq.s32.totalorder %s29, 0
      %p243 = por %p241, %p242
      %p244 = scmp.ne.s32.totalorder %s236, %s238
      %p245 = scmp.eq.s32.totalorder %s34, 1
      %p246 = por %p244, %p245
      %p247 = scmp.ne.s32.totalorder %s238, %s239
      %p248 = scmp.eq.s32.totalorder %s34, 0
      %p249 = por %p247, %p248
      %p250 = scmp.ne.s32.totalorder %s238, %s239
      %p251 = scmp.eq.s32.totalorder %s35, 1
      %p252 = por %p250, %p251
      %p254 = scmp.ne.s32.totalorder %s239, %s253
      %p255 = scmp.eq.s32.totalorder %s35, 0
      %p256 = por %p254, %p255
      %s258 = sadd.s32 %s257, 1
      %p261 = scmp.eq.s32.totalorder %s29, 1
      %p262 = scmp.ne.s32.totalorder %s257, %s259
      %p263 = scmp.eq.s32.totalorder %s29, 0
      %p264 = por %p262, %p263
      %p265 = scmp.ne.s32.totalorder %s257, %s259
      %p266 = scmp.eq.s32.totalorder %s34, 1
      %p267 = por %p265, %p266
      %p268 = scmp.ne.s32.totalorder %s259, %s260
      %p269 = scmp.eq.s32.totalorder %s34, 0
      %p270 = por %p268, %p269
      %p271 = scmp.ne.s32.totalorder %s259, %s260
      %p272 = scmp.eq.s32.totalorder %s35, 1
      %p273 = por %p271, %p272
      %p275 = scmp.ne.s32.totalorder %s260, %s274
      %p276 = scmp.eq.s32.totalorder %s35, 0
      %p277 = por %p275, %p276
      %s279 = sadd.s32 %s278, 1
      %p282 = scmp.eq.s32.totalorder %s29, 1
      %p283 = scmp.ne.s32.totalorder %s278, %s280
      %p284 = scmp.eq.s32.totalorder %s29, 0
      %p285 = por %p283, %p284
      %p286 = scmp.ne.s32.totalorder %s278, %s280
      %p287 = scmp.eq.s32.totalorder %s34, 1
      %p288 = por %p286, %p287
      %p289 = scmp.ne.s32.totalorder %s280, %s281
      %p290 = scmp.eq.s32.totalorder %s34, 0
      %p291 = por %p289, %p290
      %p292 = scmp.ne.s32.totalorder %s280, %s281
      %p293 = scmp.eq.s32.totalorder %s35, 1
      %p294 = por %p292, %p293
      %p296 = scmp.ne.s32.totalorder %s281, %s295
      %p297 = scmp.eq.s32.totalorder %s35, 0
      %p298 = por %p296, %p297
      %s300 = sadd.s32 %s299, 1
      %p303 = scmp.eq.s32.totalorder %s29, 1
      %p304 = scmp.ne.s32.totalorder %s299, %s301
      %p305 = scmp.eq.s32.totalorder %s29, 0
      %p306 = por %p304, %p305
      %p307 = scmp.ne.s32.totalorder %s299, %s301
      %p308 = scmp.eq.s32.totalorder %s34, 1
      %p309 = por %p307, %p308
      %p310 = scmp.ne.s32.totalorder %s301, %s302
      %p311 = scmp.eq.s32.totalorder %s34, 0
      %p312 = por %p310, %p311
      %p313 = scmp.ne.s32.totalorder %s301, %s302
      %p314 = scmp.eq.s32.totalorder %s35, 1
      %p315 = por %p313, %p314
      %p317 = scmp.ne.s32.totalorder %s302, %s316
      %p318 = scmp.eq.s32.totalorder %s35, 0
      %p319 = por %p317, %p318
      %s321 = sadd.s32 %s320, 1
      %p324 = scmp.eq.s32.totalorder %s29, 1
      %p325 = scmp.ne.s32.totalorder %s320, %s322
      %p326 = scmp.eq.s32.totalorder %s29, 0
      %p327 = por %p325, %p326
      %p328 = scmp.ne.s32.totalorder %s320, %s322
      %p329 = scmp.eq.s32.totalorder %s34, 1
      %p330 = por %p328, %p329
      %p331 = scmp.ne.s32.totalorder %s322, %s323
      %p332 = scmp.eq.s32.totalorder %s34, 0
      %p333 = por %p331, %p332
      %p334 = scmp.ne.s32.totalorder %s322, %s323
      %p335 = scmp.eq.s32.totalorder %s35, 1
      %p336 = por %p334, %p335
      %p338 = scmp.ne.s32.totalorder %s323, %s337
      %p339 = scmp.eq.s32.totalorder %s35, 0
      %p340 = por %p338, %p339
      %s341 = ssub.s32 %s29, %s36
      %p342 = scmp.eq.s32.totalorder %s341, 0
      %s344 = sadd.s32 %s343, 1
      %s345 = scalar_select %p342, %s343, %s344
      %p348 = pneg %p342
      %p349 = scmp.eq.s32.totalorder %s29, 1
      %p350 = por %p348, %p349
      %p351 = scmp.ne.s32.totalorder %s343, %s346
      %p352 = scmp.eq.s32.totalorder %s29, 0
      %p353 = por %p351, %p352
      %p354 = scmp.ne.s32.totalorder %s343, %s346
      %p355 = scmp.eq.s32.totalorder %s34, 1
      %p356 = por %p354, %p355
      %p357 = scmp.ne.s32.totalorder %s346, %s347
      %p358 = scmp.eq.s32.totalorder %s34, 0
      %p359 = por %p357, %p358
      %p360 = scmp.ne.s32.totalorder %s346, %s347
      %p361 = scmp.eq.s32.totalorder %s35, 1
      %p362 = por %p360, %p361
      %p364 = scmp.ne.s32.totalorder %s347, %s363
      %p365 = scmp.eq.s32.totalorder %s35, 0
      %p366 = por %p364, %p365
      %p367 = scmp.le.s32.totalorder 1, %s29
      %p368 = scmp.lt.s32.totalorder %s29, 3
      %p369 = pnand %p367, %p368
      %p370 = pneg %p369
      // Predicated region
      $region9: #{tpu_custom_call.1} parent=5 // pred_check
        _
      $region10: #{tpu_custom_call.1} parent=5 // pred_check_branch
        %372 = sbr.rel (%p369) target = $region12
      $region11: #{tpu_custom_call.1} parent=5 // pred_region
        %s373 = ssub.s32 %s29, 1
        // Predicated region
        $region13: #{tpu_custom_call.1} parent=11 // pred_check
          %p374 = pneg %p102
        $region14: #{tpu_custom_call.1} parent=11 // pred_check_branch
          %376 = sbr.rel (%p374) target = $region16
        $region15: #{tpu_custom_call.1} parent=11 // pred_region
          %s378 = ssub.s32 16, 16
          %379 = vsyncadd [#allocation7], %s378
          %s381 = sshll.u32 [#allocation6], 4
          %s382 = int_to_ptr.vmem [resolvable:$true] %s381
          %384 = dma.hbm_to_vmem [thread:$0]  %s2, 16, %s382, [#allocation7]
        $region16: #{tpu_custom_call.1} parent=11 // pred_fallthru
          _
        // Predicated region
        $region17: #{tpu_custom_call.1} parent=11 // pred_check
          %p385 = pneg %p123
        $region18: #{tpu_custom_call.1} parent=11 // pred_check_branch
          %387 = sbr.rel (%p385) target = $region20
        $region19: #{tpu_custom_call.1} parent=11 // pred_region
          %s389 = ssub.s32 16, 16
          %390 = vsyncadd [#allocation7], %s389
          %s392 = sshll.u32 [#allocation8], 4
          %s393 = int_to_ptr.vmem [resolvable:$true] %s392
          %395 = dma.hbm_to_vmem [thread:$0]  %s3, 16, %s393, [#allocation7]
        $region20: #{tpu_custom_call.1} parent=11 // pred_fallthru
          _
        // Predicated region
        $region21: #{tpu_custom_call.1} parent=11 // pred_check
          %p396 = pneg %p144
        $region22: #{tpu_custom_call.1} parent=11 // pred_check_branch
          %398 = sbr.rel (%p396) target = $region24
        $region23: #{tpu_custom_call.1} parent=11 // pred_region
          _
        $region24: #{tpu_custom_call.1} parent=11 // pred_fallthru
          _
        // Predicated region
        $region25: #{tpu_custom_call.1} parent=11 // pred_check
          %p399 = pneg %p165
        $region26: #{tpu_custom_call.1} parent=11 // pred_check_branch
          %401 = sbr.rel (%p399) target = $region28
        $region27: #{tpu_custom_call.1} parent=11 // pred_region
          %s403 = ssub.s32 16, 16
          %404 = vsyncadd [#allocation10], %s403
          %s406 = sshll.u32 [#allocation9], 4
          %s407 = int_to_ptr.vmem [resolvable:$true] %s406
          %409 = dma.hbm_to_vmem [thread:$0]  %s5, 16, %s407, [#allocation10]
        $region28: #{tpu_custom_call.1} parent=11 // pred_fallthru
          _
        // Predicated region
        $region29: #{tpu_custom_call.1} parent=11 // pred_check
          %p410 = pneg %p186
        $region30: #{tpu_custom_call.1} parent=11 // pred_check_branch
          %412 = sbr.rel (%p410) target = $region32
        $region31: #{tpu_custom_call.1} parent=11 // pred_region
          _
        $region32: #{tpu_custom_call.1} parent=11 // pred_fallthru
          _
        // Predicated region
        $region33: #{tpu_custom_call.1} parent=11 // pred_check
          %p413 = pneg %p207
        $region34: #{tpu_custom_call.1} parent=11 // pred_check_branch
          %415 = sbr.rel (%p413) target = $region36
        $region35: #{tpu_custom_call.1} parent=11 // pred_region
          %s417 = ssub.s32 16, 16
          %418 = vsyncadd [#allocation10], %s417
          %s420 = sshll.u32 [#allocation11], 4
          %s421 = int_to_ptr.vmem [resolvable:$true] %s420
          %423 = dma.hbm_to_vmem [thread:$0]  %s7, 16, %s421, [#allocation10]
        $region36: #{tpu_custom_call.1} parent=11 // pred_fallthru
          _
        // Predicated region
        $region37: #{tpu_custom_call.1} parent=11 // pred_check
          %p424 = pneg %p228
        $region38: #{tpu_custom_call.1} parent=11 // pred_check_branch
          %426 = sbr.rel (%p424) target = $region40
        $region39: #{tpu_custom_call.1} parent=11 // pred_region
          %s428 = ssub.s32 16, 16
          %429 = vsyncadd [#allocation13], %s428
          %s431 = sshll.u32 [#allocation12], 4
          %s432 = int_to_ptr.vmem [resolvable:$true] %s431
          %434 = dma.hbm_to_vmem [thread:$0]  %s8, 16, %s432, [#allocation13]
        $region40: #{tpu_custom_call.1} parent=11 // pred_fallthru
          _
        // Predicated region
        $region41: #{tpu_custom_call.1} parent=11 // pred_check
          %p435 = pneg %p249
        $region42: #{tpu_custom_call.1} parent=11 // pred_check_branch
          %437 = sbr.rel (%p435) target = $region44
        $region43: #{tpu_custom_call.1} parent=11 // pred_region
          %s439 = ssub.s32 16, 16
          %440 = vsyncadd [#allocation13], %s439
          %s442 = sshll.u32 [#allocation14], 4
          %s443 = int_to_ptr.vmem [resolvable:$true] %s442
          %445 = dma.hbm_to_vmem [thread:$0]  %s9, 16, %s443, [#allocation13]
        $region44: #{tpu_custom_call.1} parent=11 // pred_fallthru
          _
        // Predicated region
        $region45: #{tpu_custom_call.1} parent=11 // pred_check
          %p446 = pneg %p270
        $region46: #{tpu_custom_call.1} parent=11 // pred_check_branch
          %448 = sbr.rel (%p446) target = $region48
        $region47: #{tpu_custom_call.1} parent=11 // pred_region
          _
        $region48: #{tpu_custom_call.1} parent=11 // pred_fallthru
          _
        // Predicated region
        $region49: #{tpu_custom_call.1} parent=11 // pred_check
          %p449 = pneg %p291
        $region50: #{tpu_custom_call.1} parent=11 // pred_check_branch
          %451 = sbr.rel (%p449) target = $region52
        $region51: #{tpu_custom_call.1} parent=11 // pred_region
          _
        $region52: #{tpu_custom_call.1} parent=11 // pred_fallthru
          _
        // Predicated region
        $region53: #{tpu_custom_call.1} parent=11 // pred_check
          %p452 = pneg %p312
        $region54: #{tpu_custom_call.1} parent=11 // pred_check_branch
          %454 = sbr.rel (%p452) target = $region56
        $region55: #{tpu_custom_call.1} parent=11 // pred_region
          _
        $region56: #{tpu_custom_call.1} parent=11 // pred_fallthru
          _
        // Predicated region
        $region57: #{tpu_custom_call.1} parent=11 // pred_check
          %p455 = pneg %p333
        $region58: #{tpu_custom_call.1} parent=11 // pred_check_branch
          %457 = sbr.rel (%p455) target = $region60
        $region59: #{tpu_custom_call.1} parent=11 // pred_region
          _
        $region60: #{tpu_custom_call.1} parent=11 // pred_fallthru
          _
      $region12: #{tpu_custom_call.1} parent=5 // pred_fallthru
        _
      %p458 = scmp.lt.s32.totalorder %s29, 2
      // Predicated region
      $region61: #{tpu_custom_call.1} parent=5 // pred_check
        %p459 = pneg %p458
      $region62: #{tpu_custom_call.1} parent=5 // pred_check_branch
        %461 = sbr.rel (%p459) target = $region64
      $region63: #{tpu_custom_call.1} parent=5 // pred_region
        // Predicated region
        $region65: #{tpu_custom_call.1} parent=63 // pred_check
          %p462 = pneg %p49
        $region66: #{tpu_custom_call.1} parent=63 // pred_check_branch
          %464 = sbr.rel (%p462) target = $region68
        $region67: #{tpu_custom_call.1} parent=63 // pred_region
          %p465 = scmp.lt.s32.totalorder %s29, 1
          %s466 = scalar_select %p465, %s29, 1
          %s467 = smul.addr %s466, 8
          %s468 = scalar_lea.vmem %s0, %s467
        $region68: #{tpu_custom_call.1} parent=63 // pred_fallthru
          _
        // Predicated region
        $region69: #{tpu_custom_call.1} parent=63 // pred_check
          %p469 = pneg %p75
        $region70: #{tpu_custom_call.1} parent=63 // pred_check_branch
          %471 = sbr.rel (%p469) target = $region72
        $region71: #{tpu_custom_call.1} parent=63 // pred_region
          %s472 = sand.u32 %s65, 1
          %s473 = scalar_lea.sflag [#allocation4], %s472
          %s474 = sand.u32 %s65, 1
          %s475 = scalar_lea.vmem [#allocation3], %s474
          %s477 = ssub.s32 16, 16
          %478 = vsyncadd %s473, %s477
          %s479 = smul.addr %s29, 16
          %s480 = scalar_lea.hbm %s1, %s479
          %s482 = sshll.u32 %s475, 4
          %s483 = int_to_ptr.vmem [resolvable:$true] %s482
          %485 = dma.hbm_to_vmem [thread:$0]  %s480, 16, %s483, %s473
        $region72: #{tpu_custom_call.1} parent=63 // pred_fallthru
          _
      $region64: #{tpu_custom_call.1} parent=5 // pred_fallthru
        _
      %p486 = scmp.le.s32.totalorder 1, %s29
      %p487 = scmp.lt.s32.totalorder %s29, 3
      %p488 = pnand %p486, %p487
      %p489 = pneg %p488
      // Predicated region
      $region73: #{tpu_custom_call.1} parent=5 // pred_check
        _
      $region74: #{tpu_custom_call.1} parent=5 // pred_check_branch
        %491 = sbr.rel (%p488) target = $region76
      $region75: #{tpu_custom_call.1} parent=5 // pred_region
        %s492 = ssub.s32 %s29, 1
        %s493 = sand.u32 %s68, 1
        %s494 = scalar_lea.sflag [#allocation4], %s493
        %s495 = sand.u32 %s68, 1
        %s496 = scalar_lea.vmem [#allocation3], %s495
        // Predicated region
        $region77: #{tpu_custom_call.1} parent=75 // pred_check
          %p497 = pneg %p81
        $region78: #{tpu_custom_call.1} parent=75 // pred_check_branch
          %499 = sbr.rel (%p497) target = $region80
        $region79: #{tpu_custom_call.1} parent=75 // pred_region
          %500 = dma.done %s494, 16
        $region80: #{tpu_custom_call.1} parent=75 // pred_fallthru
          _
        // Predicated region
        $region81: #{tpu_custom_call.1} parent=75 // pred_check
          %p501 = pneg %p102
        $region82: #{tpu_custom_call.1} parent=75 // pred_check_branch
          %503 = sbr.rel (%p501) target = $region84
        $region83: #{tpu_custom_call.1} parent=75 // pred_region
          %504 = dma.done [#allocation7], 16
        $region84: #{tpu_custom_call.1} parent=75 // pred_fallthru
          _
        // Predicated region
        $region85: #{tpu_custom_call.1} parent=75 // pred_check
          %p505 = pneg %p123
        $region86: #{tpu_custom_call.1} parent=75 // pred_check_branch
          %507 = sbr.rel (%p505) target = $region88
        $region87: #{tpu_custom_call.1} parent=75 // pred_region
          %508 = dma.done [#allocation7], 16
        $region88: #{tpu_custom_call.1} parent=75 // pred_fallthru
          _
        // Predicated region
        $region89: #{tpu_custom_call.1} parent=75 // pred_check
          %p509 = pneg %p165
        $region90: #{tpu_custom_call.1} parent=75 // pred_check_branch
          %511 = sbr.rel (%p509) target = $region92
        $region91: #{tpu_custom_call.1} parent=75 // pred_region
          %512 = dma.done [#allocation10], 16
        $region92: #{tpu_custom_call.1} parent=75 // pred_fallthru
          _
        // Predicated region
        $region93: #{tpu_custom_call.1} parent=75 // pred_check
          %p513 = pneg %p207
        $region94: #{tpu_custom_call.1} parent=75 // pred_check_branch
          %515 = sbr.rel (%p513) target = $region96
        $region95: #{tpu_custom_call.1} parent=75 // pred_region
          %516 = dma.done [#allocation10], 16
        $region96: #{tpu_custom_call.1} parent=75 // pred_fallthru
          _
        // Predicated region
        $region97: #{tpu_custom_call.1} parent=75 // pred_check
          %p517 = pneg %p228
        $region98: #{tpu_custom_call.1} parent=75 // pred_check_branch
          %519 = sbr.rel (%p517) target = $region100
        $region99: #{tpu_custom_call.1} parent=75 // pred_region
          %520 = dma.done [#allocation13], 16
        $region100: #{tpu_custom_call.1} parent=75 // pred_fallthru
          _
        // Predicated region
        $region101: #{tpu_custom_call.1} parent=75 // pred_check
          %p521 = pneg %p249
        $region102: #{tpu_custom_call.1} parent=75 // pred_check_branch
          %523 = sbr.rel (%p521) target = $region104
        $region103: #{tpu_custom_call.1} parent=75 // pred_region
          %524 = dma.done [#allocation13], 16
        $region104: #{tpu_custom_call.1} parent=75 // pred_fallthru
          _
        %p525 = scmp.lt.s32.totalorder %s34, 1
        %s526 = scalar_select %p525, %s34, 1
        %s527 = smul.addr %s526, 8
        %s528 = scalar_lea.vmem %s0, %s527
        %p529 = pneg %p55
        %p530 = pneg %p52
        %s531 = sand.u32 %s68, 1
        %s532 = scalar_lea.sflag [#allocation4], %s531
        %s533 = sand.u32 %s68, 1
        %s534 = scalar_lea.vmem [#allocation3], %s533
        %p535 = pneg %p81
        %p536 = pneg %p78
        %p537 = pneg %p102
        %p538 = pneg %p99
        %p539 = pneg %p123
        %p540 = pneg %p120
        %p541 = pneg %p144
        %p542 = pneg %p141
        %p543 = pneg %p165
        %p544 = pneg %p162
        %p545 = pneg %p186
        %p546 = pneg %p183
        %p547 = pneg %p207
        %p548 = pneg %p204
        %p549 = pneg %p228
        %p550 = pneg %p225
        %p551 = pneg %p249
        %p552 = pneg %p246
        %p553 = pneg %p270
        %p554 = pneg %p267
        %p555 = pneg %p291
        %p556 = pneg %p288
        %p557 = pneg %p312
        %p558 = pneg %p309
        %p559 = pneg %p333
        %p560 = pneg %p330
        %p561 = pneg %p359
        %p562 = pneg %p356
        %s563 = sand.u32 %s346, 1
        %s564 = scalar_lea.sflag [#allocation5], %s563
        %s565 = sand.u32 %s346, 1
        %s566 = smul.addr %s565, 8
        %s567 = scalar_lea.vmem [#allocation15], %s566
        %p568 = scmp.lt.s32.totalorder %s34, 1
        %s569 = scalar_select %p568, %s34, 1
        %s570 = smul.addr %s569, 8
        %s571 = scalar_lea.vmem %s0, %s570
        %v573 = vld [vmem:[%s571] sm:$0xff]
        %v574 = vld [vmem:[%s496] sm:$0x1]
        %vm575 = vcmask 261120
        %v576 = vsel %vm575, %v573, 0.0
        %577 = vadd.xlane.f32.xlu0 %v576
        %v578 = vpop.xlane.xlu0 %577
        %v579 = vrcp.pop 32.0
        %v580 = vmul.f32 %v578, %v579
        %v581 = vsub.f32 %v573, %v580
        %v582 = vmul.f32 %v581, %v581
        %v583 = vsel %vm575, %v582, 0.0
        %584 = vadd.xlane.f32.xlu0 %v583
        %v585 = vpop.xlane.xlu0 %584
        %v586 = vmul.f32 %v585, %v579
        %v587 = vadd.f32 %v586, 1e-06
        %v588 = vrsqrt.pop %v587
        %v589 = vmul.f32 %v581, %v588
        %v590 = vld [vmem:[#allocation6] sm:$0x1]
        %v592 = vlaneseq
        %v593 = vshrl.u32 %v592, 7
        %v594 = vsub.s32 0, %v593
        %v595 = vrot.slane %v590, %v594
        %v597 = vmul.f32 %v589, %v595
        %v598 = vld [vmem:[#allocation8] sm:$0x1]
        %v600 = vlaneseq
        %v601 = vshrl.u32 %v600, 7
        %v602 = vsub.s32 0, %v601
        %v603 = vrot.slane %v598, %v602
        %v605 = vadd.f32 %v597, %v603
        %v606 = vpack.c.bf16 %v605, %v605
        %v607 = vld [vmem:[%s4] sm:$0xf]
        %v608 = vld [vmem:[%s4 + $0x4] sm:$0xf]
        %v609 = vld [vmem:[%s4 + $0x8] sm:$0xf]
        %v610 = vld [vmem:[%s4 + $0xc] sm:$0xf]
        %v611 = vld [vmem:[#allocation9] sm:$0x1]
        %v613 = vlaneseq
        %v614 = vshrl.u32 %v613, 7
        %v615 = vsub.s32 0, %v614
        %v616 = vrot.slane %v611, %v615
        %v622 = vunpack.c.l.b16 %v607
        %v623 = vunpack.c.l.b16 %v608
        %v624 = vunpack.c.l.b16 %v609
        %v625 = vunpack.c.l.b16 %v610
        %v626 = vpack.c.b16 %v623, %v622
        %v627 = vpack.c.b16 %v625, %v624
        %v631 = vsel %vm575, %v606, 0
        %633 = vmatprep.subr.bf16.mxu0 0
        %634 = vmatpush1.bf16.msra.mxu0 0
        %635 = vmatprep.subr.bf16.mxu0 0
        %636 = vmatpush1.bf16.msra.mxu0 0
        %637 = vmatprep.subr.bf16.mxu0 0
        %638 = vmatpush1.bf16.msra.mxu0 0
        %639 = vmatprep.subr.bf16.mxu0 0
        %640 = vmatpush1.bf16.msra.mxu0 0
        %641 = vmatprep.subr.bf16.mxu0 0
        %642 = vmatpush1.bf16.msra.mxu0 0
        %643 = vmatprep.subr.bf16.mxu0 0
        %644 = vmatpush1.bf16.msra.mxu0 0
        %645 = vmatprep.subr.bf16.mxu0 0
        %646 = vmatpush1.bf16.msra.mxu0 %v627
        %647 = vmatprep.subr.bf16.mxu0 0
        %648 = vmatpush1.bf16.msra.mxu0 %v626
        %649 = vmatprep.subr.bf16.mxu0 0
        %650 = vmatpush2.bf16.msra.mxu0 0
        %651 = vmatprep.subr.bf16.mxu0 0
        %652 = vmatpush2.bf16.msra.mxu0 0
        %653 = vmatprep.subr.bf16.mxu0 0
        %654 = vmatpush2.bf16.msra.mxu0 0
        %655 = vmatprep.subr.bf16.mxu0 0
        %656 = vmatpush2.bf16.msra.mxu0 0
        %657 = vmatprep.subr.bf16.mxu0 0
        %658 = vmatpush2.bf16.msra.mxu0 0
        %659 = vmatprep.subr.bf16.mxu0 0
        %660 = vmatpush2.bf16.msra.mxu0 0
        %661 = vmatprep.subr.bf16.mxu0 0
        %662 = vmatpush2.bf16.msra.mxu0 0
        %663 = vmatprep.subr.bf16.mxu0 0
        %664 = vmatpush2.bf16.msra.mxu0 0
        %665 = vmatprep.mubr.bf16.mxu0 0
        %666 = vmatmul.mubr.bf16.gmra.mxu0 %v631
        %v667 = vpop.f32.mrf.mxu0
        %v668 = vadd.f32 %v616, %v667
        %v669 = vpop.f32.mrf.mxu0
        %v670 = vpop.f32.mrf.mxu0
        %v671 = vpop.f32.mrf.mxu0
        %672 = vdwg.mxu0
        %v673 = vpack.c.bf16 %v668, %v668
        %v675 = vlaneseq
        %v676 = vshrl.u32 %v675, 7
        %v677 = vsub.s32 0, %v676
        %v678 = vrot.slane %v574, %v677
        %681 = vrot.lane.b32.xlu0 %v673, 96
        %v682 = vpop.permute.xlu0 %681
        %vm683 = vcmask 64512
        %v685 = vsel %vm683, %v673, 0
        %v688 = vsel %vm683, %v682, 0
        %690 = vmatprep.subr.bf16.mxu0 0
        %691 = vmatpush1.bf16.xpose.msra.mxu0 0
        %692 = vmatprep.subr.bf16.mxu0 0
        %693 = vmatpush1.bf16.xpose.msra.mxu0 0
        %694 = vmatprep.subr.bf16.mxu0 0
        %695 = vmatpush1.bf16.xpose.msra.mxu0 0
        %696 = vmatprep.subr.bf16.mxu0 0
        %697 = vmatpush1.bf16.xpose.msra.mxu0 0
        %698 = vmatprep.subr.bf16.mxu0 0
        %699 = vmatpush1.bf16.xpose.msra.mxu0 0
        %700 = vmatprep.subr.bf16.mxu0 0
        %701 = vmatpush1.bf16.xpose.msra.mxu0 0
        %702 = vmatprep.subr.bf16.mxu0 0
        %703 = vmatpush1.bf16.xpose.msra.mxu0 0
        %704 = vmatprep.subr.bf16.mxu0 0
        %705 = vmatpush1.bf16.xpose.msra.mxu0 %v688
        %706 = vmatprep.subr.bf16.mxu0 0
        %707 = vmatpush2.bf16.xpose.msra.mxu0 0
        %708 = vmatprep.subr.bf16.mxu0 0
        %709 = vmatpush2.bf16.xpose.msra.mxu0 0
        %710 = vmatprep.subr.bf16.mxu0 0
        %711 = vmatpush2.bf16.xpose.msra.mxu0 0
        %712 = vmatprep.subr.bf16.mxu0 0
        %713 = vmatpush2.bf16.xpose.msra.mxu0 0
        %714 = vmatprep.subr.bf16.mxu0 0
        %715 = vmatpush2.bf16.xpose.msra.mxu0 0
        %716 = vmatprep.subr.bf16.mxu0 0
        %717 = vmatpush2.bf16.xpose.msra.mxu0 0
        %718 = vmatprep.subr.bf16.mxu0 0
        %719 = vmatpush2.bf16.xpose.msra.mxu0 0
        %720 = vmatprep.subr.bf16.mxu0 0
        %721 = vmatpush2.bf16.xpose.msra.mxu0 0
        %722 = vmatprep.mubr.bf16.mxu0 0
        %723 = vmatmul.mubr.bf16.gmra.mxu0 %v685
        %v724 = vpop.f32.mrf.mxu0
        %v725 = vadd.f32 %v678, %v724
        %v726 = vpop.f32.mrf.mxu0
        %v727 = vpop.f32.mrf.mxu0
        %v728 = vpop.f32.mrf.mxu0
        %729 = vdwg.mxu0
        %v730 = vsel %vm683, %v725, -inf
        %731 = vmax.xlane.f32.xlu0 %v730
        %v732 = vpop.xlane.xlu0 %731
        %v733 = vsub.f32 %v725, %v732
        %v734 = vmul.f32 %v733, 1.442695
        %v735 = vpow.pop %v734
        %v736 = vsel %vm683, %v735, 0.0
        %737 = vadd.xlane.f32.xlu0 %v736
        %v738 = vpop.xlane.xlu0 %737
        %v739 = vrcp.pop %v738
        %v740 = vpack.c.bf16 %v735, %v735
        %741 = vrot.lane.b32.xlu0 %v673, 64
        %v742 = vpop.permute.xlu0 %741
        %v744 = vsel %vm683, %v740, 0
        %vm746 = vcmask 1043456
        %v748 = vsel %vm746, %v742, 0
        %750 = vmatprep.subr.bf16.mxu0 0
        %751 = vmatpush1.bf16.msra.mxu0 0
        %752 = vmatprep.subr.bf16.mxu0 0
        %753 = vmatpush1.bf16.msra.mxu0 0
        %754 = vmatprep.subr.bf16.mxu0 0
        %755 = vmatpush1.bf16.msra.mxu0 0
        %756 = vmatprep.subr.bf16.mxu0 0
        %757 = vmatpush1.bf16.msra.mxu0 0
        %758 = vmatprep.subr.bf16.mxu0 0
        %759 = vmatpush1.bf16.msra.mxu0 0
        %760 = vmatprep.subr.bf16.mxu0 0
        %761 = vmatpush1.bf16.msra.mxu0 0
        %762 = vmatprep.subr.bf16.mxu0 0
        %763 = vmatpush1.bf16.msra.mxu0 0
        %764 = vmatprep.subr.bf16.mxu0 0
        %765 = vmatpush1.bf16.msra.mxu0 %v748
        %766 = vmatprep.subr.bf16.mxu0 0
        %767 = vmatpush2.bf16.msra.mxu0 0
        %768 = vmatprep.subr.bf16.mxu0 0
        %769 = vmatpush2.bf16.msra.mxu0 0
        %770 = vmatprep.subr.bf16.mxu0 0
        %771 = vmatpush2.bf16.msra.mxu0 0
        %772 = vmatprep.subr.bf16.mxu0 0
        %773 = vmatpush2.bf16.msra.mxu0 0
        %774 = vmatprep.subr.bf16.mxu0 0
        %775 = vmatpush2.bf16.msra.mxu0 0
        %776 = vmatprep.subr.bf16.mxu0 0
        %777 = vmatpush2.bf16.msra.mxu0 0
        %778 = vmatprep.subr.bf16.mxu0 0
        %779 = vmatpush2.bf16.msra.mxu0 0
        %780 = vmatprep.subr.bf16.mxu0 0
        %781 = vmatpush2.bf16.msra.mxu0 0
        %782 = vmatprep.mubr.bf16.mxu0 0
        %783 = vmatmul.mubr.bf16.gmra.mxu0 %v744
        %v784 = vpop.f32.mrf.mxu0
        %v785 = vadd.f32 0.0, %v784
        %v786 = vpop.f32.mrf.mxu0
        %v787 = vpop.f32.mrf.mxu0
        %v788 = vpop.f32.mrf.mxu0
        %789 = vdwg.mxu0
        %v790 = vmul.f32 %v785, %v739
        %791 = vst.msk [vmem:[#allocation2] sm:$0xff] %vm683, %v790
        %792 = vrot.lane.b32.xlu0 %v673, 120
        %v793 = vpop.permute.xlu0 %792
        %794 = vrot.lane.b32.xlu0 %v673, 88
        %v795 = vpop.permute.xlu0 %794
        %v797 = vsel %vm683, %v793, 0
        %v800 = vsel %vm683, %v795, 0
        %802 = vmatprep.subr.bf16.mxu0 0
        %803 = vmatpush1.bf16.xpose.msra.mxu0 0
        %804 = vmatprep.subr.bf16.mxu0 0
        %805 = vmatpush1.bf16.xpose.msra.mxu0 0
        %806 = vmatprep.subr.bf16.mxu0 0
        %807 = vmatpush1.bf16.xpose.msra.mxu0 0
        %808 = vmatprep.subr.bf16.mxu0 0
        %809 = vmatpush1.bf16.xpose.msra.mxu0 0
        %810 = vmatprep.subr.bf16.mxu0 0
        %811 = vmatpush1.bf16.xpose.msra.mxu0 0
        %812 = vmatprep.subr.bf16.mxu0 0
        %813 = vmatpush1.bf16.xpose.msra.mxu0 0
        %814 = vmatprep.subr.bf16.mxu0 0
        %815 = vmatpush1.bf16.xpose.msra.mxu0 0
        %816 = vmatprep.subr.bf16.mxu0 0
        %817 = vmatpush1.bf16.xpose.msra.mxu0 %v800
        %818 = vmatprep.subr.bf16.mxu0 0
        %819 = vmatpush2.bf16.xpose.msra.mxu0 0
        %820 = vmatprep.subr.bf16.mxu0 0
        %821 = vmatpush2.bf16.xpose.msra.mxu0 0
        %822 = vmatprep.subr.bf16.mxu0 0
        %823 = vmatpush2.bf16.xpose.msra.mxu0 0
        %824 = vmatprep.subr.bf16.mxu0 0
        %825 = vmatpush2.bf16.xpose.msra.mxu0 0
        %826 = vmatprep.subr.bf16.mxu0 0
        %827 = vmatpush2.bf16.xpose.msra.mxu0 0
        %828 = vmatprep.subr.bf16.mxu0 0
        %829 = vmatpush2.bf16.xpose.msra.mxu0 0
        %830 = vmatprep.subr.bf16.mxu0 0
        %831 = vmatpush2.bf16.xpose.msra.mxu0 0
        %832 = vmatprep.subr.bf16.mxu0 0
        %833 = vmatpush2.bf16.xpose.msra.mxu0 0
        %834 = vmatprep.mubr.bf16.mxu0 0
        %835 = vmatmul.mubr.bf16.gmra.mxu0 %v797
        %v836 = vpop.f32.mrf.mxu0
        %v837 = vadd.f32 %v678, %v836
        %v838 = vpop.f32.mrf.mxu0
        %v839 = vpop.f32.mrf.mxu0
        %v840 = vpop.f32.mrf.mxu0
        %841 = vdwg.mxu0
        %v842 = vsel %vm683, %v837, -inf
        %843 = vmax.xlane.f32.xlu0 %v842
        %v844 = vpop.xlane.xlu0 %843
        %v845 = vsub.f32 %v837, %v844
        %v846 = vmul.f32 %v845, 1.442695
        %v847 = vpow.pop %v846
        %v848 = vsel %vm683, %v847, 0.0
        %849 = vadd.xlane.f32.xlu0 %v848
        %v850 = vpop.xlane.xlu0 %849
        %v851 = vrcp.pop %v850
        %v852 = vpack.c.bf16 %v847, %v847
        %853 = vrot.lane.b32.xlu0 %v673, 56
        %v854 = vpop.permute.xlu0 %853
        %v856 = vsel %vm683, %v852, 0
        %v859 = vsel %vm746, %v854, 0
        %861 = vmatprep.subr.bf16.mxu0 0
        %862 = vmatpush1.bf16.msra.mxu0 0
        %863 = vmatprep.subr.bf16.mxu0 0
        %864 = vmatpush1.bf16.msra.mxu0 0
        %865 = vmatprep.subr.bf16.mxu0 0
        %866 = vmatpush1.bf16.msra.mxu0 0
        %867 = vmatprep.subr.bf16.mxu0 0
        %868 = vmatpush1.bf16.msra.mxu0 0
        %869 = vmatprep.subr.bf16.mxu0 0
        %870 = vmatpush1.bf16.msra.mxu0 0
        %871 = vmatprep.subr.bf16.mxu0 0
        %872 = vmatpush1.bf16.msra.mxu0 0
        %873 = vmatprep.subr.bf16.mxu0 0
        %874 = vmatpush1.bf16.msra.mxu0 0
        %875 = vmatprep.subr.bf16.mxu0 0
        %876 = vmatpush1.bf16.msra.mxu0 %v859
        %877 = vmatprep.subr.bf16.mxu0 0
        %878 = vmatpush2.bf16.msra.mxu0 0
        %879 = vmatprep.subr.bf16.mxu0 0
        %880 = vmatpush2.bf16.msra.mxu0 0
        %881 = vmatprep.subr.bf16.mxu0 0
        %882 = vmatpush2.bf16.msra.mxu0 0
        %883 = vmatprep.subr.bf16.mxu0 0
        %884 = vmatpush2.bf16.msra.mxu0 0
        %885 = vmatprep.subr.bf16.mxu0 0
        %886 = vmatpush2.bf16.msra.mxu0 0
        %887 = vmatprep.subr.bf16.mxu0 0
        %888 = vmatpush2.bf16.msra.mxu0 0
        %889 = vmatprep.subr.bf16.mxu0 0
        %890 = vmatpush2.bf16.msra.mxu0 0
        %891 = vmatprep.subr.bf16.mxu0 0
        %892 = vmatpush2.bf16.msra.mxu0 0
        %893 = vmatprep.mubr.bf16.mxu0 0
        %894 = vmatmul.mubr.bf16.gmra.mxu0 %v856
        %v895 = vpop.f32.mrf.mxu0
        %v896 = vadd.f32 0.0, %v895
        %v897 = vpop.f32.mrf.mxu0
        %v898 = vpop.f32.mrf.mxu0
        %v899 = vpop.f32.mrf.mxu0
        %900 = vdwg.mxu0
        %v901 = vmul.f32 %v896, %v851
        %903 = vrot.lane.b32.xlu0 %v901, 8
        %v904 = vpop.permute.xlu0 %903
        %vm906 = vcmask 130112
        %907 = vst.msk [vmem:[#allocation2] sm:$0xff] %vm906, %v904
        %908 = vrot.lane.b32.xlu0 %v673, 112
        %v909 = vpop.permute.xlu0 %908
        %910 = vrot.lane.b32.xlu0 %v673, 80
        %v911 = vpop.permute.xlu0 %910
        %v913 = vsel %vm683, %v909, 0
        %v916 = vsel %vm683, %v911, 0
        %918 = vmatprep.subr.bf16.mxu0 0
        %919 = vmatpush1.bf16.xpose.msra.mxu0 0
        %920 = vmatprep.subr.bf16.mxu0 0
        %921 = vmatpush1.bf16.xpose.msra.mxu0 0
        %922 = vmatprep.subr.bf16.mxu0 0
        %923 = vmatpush1.bf16.xpose.msra.mxu0 0
        %924 = vmatprep.subr.bf16.mxu0 0
        %925 = vmatpush1.bf16.xpose.msra.mxu0 0
        %926 = vmatprep.subr.bf16.mxu0 0
        %927 = vmatpush1.bf16.xpose.msra.mxu0 0
        %928 = vmatprep.subr.bf16.mxu0 0
        %929 = vmatpush1.bf16.xpose.msra.mxu0 0
        %930 = vmatprep.subr.bf16.mxu0 0
        %931 = vmatpush1.bf16.xpose.msra.mxu0 0
        %932 = vmatprep.subr.bf16.mxu0 0
        %933 = vmatpush1.bf16.xpose.msra.mxu0 %v916
        %934 = vmatprep.subr.bf16.mxu0 0
        %935 = vmatpush2.bf16.xpose.msra.mxu0 0
        %936 = vmatprep.subr.bf16.mxu0 0
        %937 = vmatpush2.bf16.xpose.msra.mxu0 0
        %938 = vmatprep.subr.bf16.mxu0 0
        %939 = vmatpush2.bf16.xpose.msra.mxu0 0
        %940 = vmatprep.subr.bf16.mxu0 0
        %941 = vmatpush2.bf16.xpose.msra.mxu0 0
        %942 = vmatprep.subr.bf16.mxu0 0
        %943 = vmatpush2.bf16.xpose.msra.mxu0 0
        %944 = vmatprep.subr.bf16.mxu0 0
        %945 = vmatpush2.bf16.xpose.msra.mxu0 0
        %946 = vmatprep.subr.bf16.mxu0 0
        %947 = vmatpush2.bf16.xpose.msra.mxu0 0
        %948 = vmatprep.subr.bf16.mxu0 0
        %949 = vmatpush2.bf16.xpose.msra.mxu0 0
        %950 = vmatprep.mubr.bf16.mxu0 0
        %951 = vmatmul.mubr.bf16.gmra.mxu0 %v913
        %v952 = vpop.f32.mrf.mxu0
        %v953 = vadd.f32 %v678, %v952
        %v954 = vpop.f32.mrf.mxu0
        %v955 = vpop.f32.mrf.mxu0
        %v956 = vpop.f32.mrf.mxu0
        %957 = vdwg.mxu0
        %v958 = vsel %vm683, %v953, -inf
        %959 = vmax.xlane.f32.xlu0 %v958
        %v960 = vpop.xlane.xlu0 %959
        %v961 = vsub.f32 %v953, %v960
        %v962 = vmul.f32 %v961, 1.442695
        %v963 = vpow.pop %v962
        %v964 = vsel %vm683, %v963, 0.0
        %965 = vadd.xlane.f32.xlu0 %v964
        %v966 = vpop.xlane.xlu0 %965
        %v967 = vrcp.pop %v966
        %v968 = vpack.c.bf16 %v963, %v963
        %969 = vrot.lane.b32.xlu0 %v673, 48
        %v970 = vpop.permute.xlu0 %969
        %v972 = vsel %vm683, %v968, 0
        %v975 = vsel %vm746, %v970, 0
        %977 = vmatprep.subr.bf16.mxu0 0
        %978 = vmatpush1.bf16.msra.mxu0 0
        %979 = vmatprep.subr.bf16.mxu0 0
        %980 = vmatpush1.bf16.msra.mxu0 0
        %981 = vmatprep.subr.bf16.mxu0 0
        %982 = vmatpush1.bf16.msra.mxu0 0
        %983 = vmatprep.subr.bf16.mxu0 0
        %984 = vmatpush1.bf16.msra.mxu0 0
        %985 = vmatprep.subr.bf16.mxu0 0
        %986 = vmatpush1.bf16.msra.mxu0 0
        %987 = vmatprep.subr.bf16.mxu0 0
        %988 = vmatpush1.bf16.msra.mxu0 0
        %989 = vmatprep.subr.bf16.mxu0 0
        %990 = vmatpush1.bf16.msra.mxu0 0
        %991 = vmatprep.subr.bf16.mxu0 0
        %992 = vmatpush1.bf16.msra.mxu0 %v975
        %993 = vmatprep.subr.bf16.mxu0 0
        %994 = vmatpush2.bf16.msra.mxu0 0
        %995 = vmatprep.subr.bf16.mxu0 0
        %996 = vmatpush2.bf16.msra.mxu0 0
        %997 = vmatprep.subr.bf16.mxu0 0
        %998 = vmatpush2.bf16.msra.mxu0 0
        %999 = vmatprep.subr.bf16.mxu0 0
        %1000 = vmatpush2.bf16.msra.mxu0 0
        %1001 = vmatprep.subr.bf16.mxu0 0
        %1002 = vmatpush2.bf16.msra.mxu0 0
        %1003 = vmatprep.subr.bf16.mxu0 0
        %1004 = vmatpush2.bf16.msra.mxu0 0
        %1005 = vmatprep.subr.bf16.mxu0 0
        %1006 = vmatpush2.bf16.msra.mxu0 0
        %1007 = vmatprep.subr.bf16.mxu0 0
        %1008 = vmatpush2.bf16.msra.mxu0 0
        %1009 = vmatprep.mubr.bf16.mxu0 0
        %1010 = vmatmul.mubr.bf16.gmra.mxu0 %v972
        %v1011 = vpop.f32.mrf.mxu0
        %v1012 = vadd.f32 0.0, %v1011
        %v1013 = vpop.f32.mrf.mxu0
        %v1014 = vpop.f32.mrf.mxu0
        %v1015 = vpop.f32.mrf.mxu0
        %1016 = vdwg.mxu0
        %v1017 = vmul.f32 %v1012, %v967
        %1019 = vrot.lane.b32.xlu0 %v1017, 16
        %v1020 = vpop.permute.xlu0 %1019
        %vm1022 = vcmask 195712
        %1023 = vst.msk [vmem:[#allocation2] sm:$0xff] %vm1022, %v1020
        %1024 = vrot.lane.b32.xlu0 %v673, 104
        %v1025 = vpop.permute.xlu0 %1024
        %1026 = vrot.lane.b32.xlu0 %v673, 72
        %v1027 = vpop.permute.xlu0 %1026
        %v1029 = vsel %vm683, %v1025, 0
        %v1032 = vsel %vm683, %v1027, 0
        %1034 = vmatprep.subr.bf16.mxu0 0
        %1035 = vmatpush1.bf16.xpose.msra.mxu0 0
        %1036 = vmatprep.subr.bf16.mxu0 0
        %1037 = vmatpush1.bf16.xpose.msra.mxu0 0
        %1038 = vmatprep.subr.bf16.mxu0 0
        %1039 = vmatpush1.bf16.xpose.msra.mxu0 0
        %1040 = vmatprep.subr.bf16.mxu0 0
        %1041 = vmatpush1.bf16.xpose.msra.mxu0 0
        %1042 = vmatprep.subr.bf16.mxu0 0
        %1043 = vmatpush1.bf16.xpose.msra.mxu0 0
        %1044 = vmatprep.subr.bf16.mxu0 0
        %1045 = vmatpush1.bf16.xpose.msra.mxu0 0
        %1046 = vmatprep.subr.bf16.mxu0 0
        %1047 = vmatpush1.bf16.xpose.msra.mxu0 0
        %1048 = vmatprep.subr.bf16.mxu0 0
        %1049 = vmatpush1.bf16.xpose.msra.mxu0 %v1032
        %1050 = vmatprep.subr.bf16.mxu0 0
        %1051 = vmatpush2.bf16.xpose.msra.mxu0 0
        %1052 = vmatprep.subr.bf16.mxu0 0
        %1053 = vmatpush2.bf16.xpose.msra.mxu0 0
        %1054 = vmatprep.subr.bf16.mxu0 0
        %1055 = vmatpush2.bf16.xpose.msra.mxu0 0
        %1056 = vmatprep.subr.bf16.mxu0 0
        %1057 = vmatpush2.bf16.xpose.msra.mxu0 0
        %1058 = vmatprep.subr.bf16.mxu0 0
        %1059 = vmatpush2.bf16.xpose.msra.mxu0 0
        %1060 = vmatprep.subr.bf16.mxu0 0
        %1061 = vmatpush2.bf16.xpose.msra.mxu0 0
        %1062 = vmatprep.subr.bf16.mxu0 0
        %1063 = vmatpush2.bf16.xpose.msra.mxu0 0
        %1064 = vmatprep.subr.bf16.mxu0 0
        %1065 = vmatpush2.bf16.xpose.msra.mxu0 0
        %1066 = vmatprep.mubr.bf16.mxu0 0
        %1067 = vmatmul.mubr.bf16.gmra.mxu0 %v1029
        %v1068 = vpop.f32.mrf.mxu0
        %v1069 = vadd.f32 %v678, %v1068
        %v1070 = vpop.f32.mrf.mxu0
        %v1071 = vpop.f32.mrf.mxu0
        %v1072 = vpop.f32.mrf.mxu0
        %1073 = vdwg.mxu0
        %v1074 = vsel %vm683, %v1069, -inf
        %1075 = vmax.xlane.f32.xlu0 %v1074
        %v1076 = vpop.xlane.xlu0 %1075
        %v1077 = vsub.f32 %v1069, %v1076
        %v1078 = vmul.f32 %v1077, 1.442695
        %v1079 = vpow.pop %v1078
        %v1080 = vsel %vm683, %v1079, 0.0
        %1081 = vadd.xlane.f32.xlu0 %v1080
        %v1082 = vpop.xlane.xlu0 %1081
        %v1083 = vrcp.pop %v1082
        %v1084 = vpack.c.bf16 %v1079, %v1079
        %1085 = vrot.lane.b32.xlu0 %v673, 40
        %v1086 = vpop.permute.xlu0 %1085
        %v1088 = vsel %vm683, %v1084, 0
        %v1091 = vsel %vm746, %v1086, 0
        %1093 = vmatprep.subr.bf16.mxu0 0
        %1094 = vmatpush1.bf16.msra.mxu0 0
        %1095 = vmatprep.subr.bf16.mxu0 0
        %1096 = vmatpush1.bf16.msra.mxu0 0
        %1097 = vmatprep.subr.bf16.mxu0 0
        %1098 = vmatpush1.bf16.msra.mxu0 0
        %1099 = vmatprep.subr.bf16.mxu0 0
        %1100 = vmatpush1.bf16.msra.mxu0 0
        %1101 = vmatprep.subr.bf16.mxu0 0
        %1102 = vmatpush1.bf16.msra.mxu0 0
        %1103 = vmatprep.subr.bf16.mxu0 0
        %1104 = vmatpush1.bf16.msra.mxu0 0
        %1105 = vmatprep.subr.bf16.mxu0 0
        %1106 = vmatpush1.bf16.msra.mxu0 0
        %1107 = vmatprep.subr.bf16.mxu0 0
        %1108 = vmatpush1.bf16.msra.mxu0 %v1091
        %1109 = vmatprep.subr.bf16.mxu0 0
        %1110 = vmatpush2.bf16.msra.mxu0 0
        %1111 = vmatprep.subr.bf16.mxu0 0
        %1112 = vmatpush2.bf16.msra.mxu0 0
        %1113 = vmatprep.subr.bf16.mxu0 0
        %1114 = vmatpush2.bf16.msra.mxu0 0
        %1115 = vmatprep.subr.bf16.mxu0 0
        %1116 = vmatpush2.bf16.msra.mxu0 0
        %1117 = vmatprep.subr.bf16.mxu0 0
        %1118 = vmatpush2.bf16.msra.mxu0 0
        %1119 = vmatprep.subr.bf16.mxu0 0
        %1120 = vmatpush2.bf16.msra.mxu0 0
        %1121 = vmatprep.subr.bf16.mxu0 0
        %1122 = vmatpush2.bf16.msra.mxu0 0
        %1123 = vmatprep.subr.bf16.mxu0 0
        %1124 = vmatpush2.bf16.msra.mxu0 0
        %1125 = vmatprep.mubr.bf16.mxu0 0
        %1126 = vmatmul.mubr.bf16.gmra.mxu0 %v1088
        %v1127 = vpop.f32.mrf.mxu0
        %v1128 = vadd.f32 0.0, %v1127
        %v1129 = vpop.f32.mrf.mxu0
        %v1130 = vpop.f32.mrf.mxu0
        %v1131 = vpop.f32.mrf.mxu0
        %1132 = vdwg.mxu0
        %v1133 = vmul.f32 %v1128, %v1083
        %1135 = vrot.lane.b32.xlu0 %v1133, 24
        %v1136 = vpop.permute.xlu0 %1135
        %vm1138 = vcmask 261312
        %1139 = vst.msk [vmem:[#allocation2] sm:$0xff] %vm1138, %v1136
        %v1140 = vld [vmem:[#allocation2] sm:$0xff]
        %v1141 = vpack.c.bf16 %v1140, %v1140
        %v1142 = vld [vmem:[%s6] sm:$0xf]
        %v1143 = vld [vmem:[%s6 + $0x4] sm:$0xf]
        %v1144 = vld [vmem:[%s6 + $0x8] sm:$0xf]
        %v1145 = vld [vmem:[%s6 + $0xc] sm:$0xf]
        %v1146 = vld [vmem:[#allocation11] sm:$0x1]
        %v1148 = vlaneseq
        %v1149 = vshrl.u32 %v1148, 7
        %v1150 = vsub.s32 0, %v1149
        %v1151 = vrot.slane %v1146, %v1150
        %v1157 = vunpack.c.l.b16 %v1142
        %v1158 = vunpack.c.l.b16 %v1143
        %v1159 = vunpack.c.l.b16 %v1144
        %v1160 = vunpack.c.l.b16 %v1145
        %v1161 = vpack.c.b16 %v1158, %v1157
        %v1162 = vpack.c.b16 %v1160, %v1159
        %v1166 = vsel %vm575, %v1141, 0
        %1168 = vmatprep.subr.bf16.mxu0 0
        %1169 = vmatpush1.bf16.msra.mxu0 0
        %1170 = vmatprep.subr.bf16.mxu0 0
        %1171 = vmatpush1.bf16.msra.mxu0 0
        %1172 = vmatprep.subr.bf16.mxu0 0
        %1173 = vmatpush1.bf16.msra.mxu0 0
        %1174 = vmatprep.subr.bf16.mxu0 0
        %1175 = vmatpush1.bf16.msra.mxu0 0
        %1176 = vmatprep.subr.bf16.mxu0 0
        %1177 = vmatpush1.bf16.msra.mxu0 0
        %1178 = vmatprep.subr.bf16.mxu0 0
        %1179 = vmatpush1.bf16.msra.mxu0 0
        %1180 = vmatprep.subr.bf16.mxu0 0
        %1181 = vmatpush1.bf16.msra.mxu0 %v1162
        %1182 = vmatprep.subr.bf16.mxu0 0
        %1183 = vmatpush1.bf16.msra.mxu0 %v1161
        %1184 = vmatprep.subr.bf16.mxu0 0
        %1185 = vmatpush2.bf16.msra.mxu0 0
        %1186 = vmatprep.subr.bf16.mxu0 0
        %1187 = vmatpush2.bf16.msra.mxu0 0
        %1188 = vmatprep.subr.bf16.mxu0 0
        %1189 = vmatpush2.bf16.msra.mxu0 0
        %1190 = vmatprep.subr.bf16.mxu0 0
        %1191 = vmatpush2.bf16.msra.mxu0 0
        %1192 = vmatprep.subr.bf16.mxu0 0
        %1193 = vmatpush2.bf16.msra.mxu0 0
        %1194 = vmatprep.subr.bf16.mxu0 0
        %1195 = vmatpush2.bf16.msra.mxu0 0
        %1196 = vmatprep.subr.bf16.mxu0 0
        %1197 = vmatpush2.bf16.msra.mxu0 0
        %1198 = vmatprep.subr.bf16.mxu0 0
        %1199 = vmatpush2.bf16.msra.mxu0 0
        %1200 = vmatprep.mubr.bf16.mxu0 0
        %1201 = vmatmul.mubr.bf16.gmra.mxu0 %v1166
        %v1202 = vpop.f32.mrf.mxu0
        %v1203 = vadd.f32 %v1151, %v1202
        %v1204 = vpop.f32.mrf.mxu0
        %v1205 = vpop.f32.mrf.mxu0
        %v1206 = vpop.f32.mrf.mxu0
        %1207 = vdwg.mxu0
        %v1208 = vadd.f32 %v1203, %v573
        %v1209 = vsel %vm575, %v1208, 0.0
        %1210 = vadd.xlane.f32.xlu0 %v1209
        %v1211 = vpop.xlane.xlu0 %1210
        %v1212 = vmul.f32 %v1211, %v579
        %v1213 = vsub.f32 %v1208, %v1212
        %v1214 = vmul.f32 %v1213, %v1213
        %v1215 = vsel %vm575, %v1214, 0.0
        %1216 = vadd.xlane.f32.xlu0 %v1215
        %v1217 = vpop.xlane.xlu0 %1216
        %v1218 = vmul.f32 %v1217, %v579
        %v1219 = vadd.f32 %v1218, 1e-06
        %v1220 = vrsqrt.pop %v1219
        %v1221 = vmul.f32 %v1213, %v1220
        %v1222 = vld [vmem:[#allocation12] sm:$0x1]
        %v1224 = vlaneseq
        %v1225 = vshrl.u32 %v1224, 7
        %v1226 = vsub.s32 0, %v1225
        %v1227 = vrot.slane %v1222, %v1226
        %v1229 = vmul.f32 %v1221, %v1227
        %v1230 = vld [vmem:[#allocation14] sm:$0x1]
        %v1232 = vlaneseq
        %v1233 = vshrl.u32 %v1232, 7
        %v1234 = vsub.s32 0, %v1233
        %v1235 = vrot.slane %v1230, %v1234
        %v1237 = vadd.f32 %v1229, %v1235
        %v1238 = vpack.c.bf16 %v1237, %v1237
        %v1239 = vld [vmem:[%s10] sm:$0xf]
        %v1240 = vld [vmem:[%s10 + $0x4] sm:$0xf]
        %v1241 = vld [vmem:[%s10 + $0x8] sm:$0xf]
        %v1242 = vld [vmem:[%s10 + $0xc] sm:$0xf]
        %v1243 = vld [vmem:[%s11] sm:$0x1]
        %v1245 = vlaneseq
        %v1246 = vshrl.u32 %v1245, 7
        %v1247 = vsub.s32 0, %v1246
        %v1248 = vrot.slane %v1243, %v1247
        %v1254 = vunpack.c.l.b16 %v1239
        %v1255 = vunpack.c.l.b16 %v1240
        %v1256 = vunpack.c.l.b16 %v1241
        %v1257 = vunpack.c.l.b16 %v1242
        %v1258 = vpack.c.b16 %v1255, %v1254
        %v1259 = vpack.c.b16 %v1257, %v1256
        %v1263 = vsel %vm575, %v1238, 0
        %1265 = vmatprep.subr.bf16.mxu0 0
        %1266 = vmatpush1.bf16.msra.mxu0 0
        %1267 = vmatprep.subr.bf16.mxu0 0
        %1268 = vmatpush1.bf16.msra.mxu0 0
        %1269 = vmatprep.subr.bf16.mxu0 0
        %1270 = vmatpush1.bf16.msra.mxu0 0
        %1271 = vmatprep.subr.bf16.mxu0 0
        %1272 = vmatpush1.bf16.msra.mxu0 0
        %1273 = vmatprep.subr.bf16.mxu0 0
        %1274 = vmatpush1.bf16.msra.mxu0 0
        %1275 = vmatprep.subr.bf16.mxu0 0
        %1276 = vmatpush1.bf16.msra.mxu0 0
        %1277 = vmatprep.subr.bf16.mxu0 0
        %1278 = vmatpush1.bf16.msra.mxu0 %v1259
        %1279 = vmatprep.subr.bf16.mxu0 0
        %1280 = vmatpush1.bf16.msra.mxu0 %v1258
        %1281 = vmatprep.subr.bf16.mxu0 0
        %1282 = vmatpush2.bf16.msra.mxu0 0
        %1283 = vmatprep.subr.bf16.mxu0 0
        %1284 = vmatpush2.bf16.msra.mxu0 0
        %1285 = vmatprep.subr.bf16.mxu0 0
        %1286 = vmatpush2.bf16.msra.mxu0 0
        %1287 = vmatprep.subr.bf16.mxu0 0
        %1288 = vmatpush2.bf16.msra.mxu0 0
        %1289 = vmatprep.subr.bf16.mxu0 0
        %1290 = vmatpush2.bf16.msra.mxu0 0
        %1291 = vmatprep.subr.bf16.mxu0 0
        %1292 = vmatpush2.bf16.msra.mxu0 0
        %1293 = vmatprep.subr.bf16.mxu0 0
        %1294 = vmatpush2.bf16.msra.mxu0 0
        %1295 = vmatprep.subr.bf16.mxu0 0
        %1296 = vmatpush2.bf16.msra.mxu0 0
        %1297 = vmatprep.mubr.bf16.mxu0 0
        %1298 = vmatmul.mubr.bf16.gmra.mxu0 %v1263
        %v1299 = vpop.f32.mrf.mxu0
        %v1300 = vadd.f32 %v1248, %v1299
        %v1301 = vpop.f32.mrf.mxu0
        %v1302 = vpop.f32.mrf.mxu0
        %v1303 = vpop.f32.mrf.mxu0
        %1304 = vdwg.mxu0
        %v1305 = vmax.f32 %v1300, 0.0
        %v1306 = vpack.c.bf16 %v1305, %v1305
        %v1307 = vld [vmem:[%s12] sm:$0xf]
        %v1308 = vld [vmem:[%s12 + $0x4] sm:$0xf]
        %v1309 = vld [vmem:[%s12 + $0x8] sm:$0xf]
        %v1310 = vld [vmem:[%s12 + $0xc] sm:$0xf]
        %v1311 = vld [vmem:[%s12 + $0x10] sm:$0xf]
        %v1312 = vld [vmem:[%s12 + $0x14] sm:$0xf]
        %v1313 = vld [vmem:[%s12 + $0x18] sm:$0xf]
        %v1314 = vld [vmem:[%s12 + $0x1c] sm:$0xf]
        %v1315 = vld [vmem:[%s13] sm:$0x1]
        %v1317 = vlaneseq
        %v1318 = vshrl.u32 %v1317, 7
        %v1319 = vsub.s32 0, %v1318
        %v1320 = vrot.slane %v1315, %v1319
        %v1330 = vunpack.c.l.b16 %v1307
        %v1331 = vunpack.c.l.b16 %v1308
        %v1332 = vunpack.c.l.b16 %v1309
        %v1333 = vunpack.c.l.b16 %v1310
        %v1334 = vunpack.c.l.b16 %v1311
        %v1335 = vunpack.c.l.b16 %v1312
        %v1336 = vunpack.c.l.b16 %v1313
        %v1337 = vunpack.c.l.b16 %v1314
        %v1338 = vpack.c.b16 %v1331, %v1330
        %v1339 = vpack.c.b16 %v1333, %v1332
        %v1340 = vpack.c.b16 %v1335, %v1334
        %v1341 = vpack.c.b16 %v1337, %v1336
        %vm1346 = vcmask 523264
        %v1348 = vsel %vm1346, %v1306, 0
        %1350 = vmatprep.subr.bf16.mxu0 0
        %1351 = vmatpush1.bf16.msra.mxu0 0
        %1352 = vmatprep.subr.bf16.mxu0 0
        %1353 = vmatpush1.bf16.msra.mxu0 0
        %1354 = vmatprep.subr.bf16.mxu0 0
        %1355 = vmatpush1.bf16.msra.mxu0 0
        %1356 = vmatprep.subr.bf16.mxu0 0
        %1357 = vmatpush1.bf16.msra.mxu0 0
        %1358 = vmatprep.subr.bf16.mxu0 0
        %1359 = vmatpush1.bf16.msra.mxu0 %v1341
        %1360 = vmatprep.subr.bf16.mxu0 0
        %1361 = vmatpush1.bf16.msra.mxu0 %v1340
        %1362 = vmatprep.subr.bf16.mxu0 0
        %1363 = vmatpush1.bf16.msra.mxu0 %v1339
        %1364 = vmatprep.subr.bf16.mxu0 0
        %1365 = vmatpush1.bf16.msra.mxu0 %v1338
        %1366 = vmatprep.subr.bf16.mxu0 0
        %1367 = vmatpush2.bf16.msra.mxu0 0
        %1368 = vmatprep.subr.bf16.mxu0 0
        %1369 = vmatpush2.bf16.msra.mxu0 0
        %1370 = vmatprep.subr.bf16.mxu0 0
        %1371 = vmatpush2.bf16.msra.mxu0 0
        %1372 = vmatprep.subr.bf16.mxu0 0
        %1373 = vmatpush2.bf16.msra.mxu0 0
        %1374 = vmatprep.subr.bf16.mxu0 0
        %1375 = vmatpush2.bf16.msra.mxu0 0
        %1376 = vmatprep.subr.bf16.mxu0 0
        %1377 = vmatpush2.bf16.msra.mxu0 0
        %1378 = vmatprep.subr.bf16.mxu0 0
        %1379 = vmatpush2.bf16.msra.mxu0 0
        %1380 = vmatprep.subr.bf16.mxu0 0
        %1381 = vmatpush2.bf16.msra.mxu0 0
        %1382 = vmatprep.mubr.bf16.mxu0 0
        %1383 = vmatmul.mubr.bf16.gmra.mxu0 %v1348
        %v1384 = vpop.f32.mrf.mxu0
        %v1385 = vadd.f32 %v1320, %v1384
        %v1386 = vpop.f32.mrf.mxu0
        %v1387 = vpop.f32.mrf.mxu0
        %v1388 = vpop.f32.mrf.mxu0
        %1389 = vdwg.mxu0
        %v1390 = vadd.f32 %v1385, %v1208
        %1391 = vst.msk [vmem:[%s567] sm:$0xff] %vm575, %v1390
        %s1392 = sand.u32 %s346, 1
        %s1393 = scalar_lea.sflag [#allocation5], %s1392
        %s1394 = sand.u32 %s346, 1
        %s1395 = smul.addr %s1394, 8
        %s1396 = scalar_lea.vmem [#allocation15], %s1395
        // Predicated region
        $region105: #{tpu_custom_call.1} parent=75 // pred_check
          %p1397 = pneg %p356
        $region106: #{tpu_custom_call.1} parent=75 // pred_check_branch
          %1399 = sbr.rel (%p1397) target = $region108
        $region107: #{tpu_custom_call.1} parent=75 // pred_region
          %s1401 = ssub.s32 128, 128
          %1402 = vsyncadd %s1393, %s1401
          %s1403 = smul.addr %s34, 128
          %s1404 = scalar_lea.hbm %s14, %s1403
          %s1406 = sshll.u32 %s1396, 4
          %s1407 = int_to_ptr.vmem [resolvable:$true] %s1406
          %1409 = dma.vmem_to_hbm [thread:$0]  %s1407, 128, %s1404, %s1393
        $region108: #{tpu_custom_call.1} parent=75 // pred_fallthru
          _
      $region76: #{tpu_custom_call.1} parent=5 // pred_fallthru
        _
      %p1410 = scmp.le.s32.totalorder 2, %s29
      // Predicated region
      $region109: #{tpu_custom_call.1} parent=5 // pred_check
        %p1411 = pneg %p1410
      $region110: #{tpu_custom_call.1} parent=5 // pred_check_branch
        %1413 = sbr.rel (%p1411) target = $region112
      $region111: #{tpu_custom_call.1} parent=5 // pred_region
        %s1414 = ssub.s32 %s29, 2
        // Predicated region
        $region113: #{tpu_custom_call.1} parent=111 // pred_check
          %p1415 = pneg %p362
        $region114: #{tpu_custom_call.1} parent=111 // pred_check_branch
          %1417 = sbr.rel (%p1415) target = $region116
        $region115: #{tpu_custom_call.1} parent=111 // pred_region
          %s1418 = sand.u32 %s347, 1
          %s1419 = scalar_lea.sflag [#allocation5], %s1418
          %s1420 = sand.u32 %s347, 1
          %s1421 = smul.addr %s1420, 8
          %s1422 = scalar_lea.vmem [#allocation15], %s1421
          %1423 = dma.done %s1419, 128
        $region116: #{tpu_custom_call.1} parent=111 // pred_fallthru
          _
      $region112: #{tpu_custom_call.1} parent=5 // pred_fallthru
        _
    $region6: #{tpu_custom_call.1} parent=1 // loop_footer
      %s33 = sadd.s32 1, %s29
    $region7: #{tpu_custom_call.1} parent=1 // loop_footer_branch
      %28 = sbr.rel target = $region3
    $region8: #{tpu_custom_call.1} parent=1 // loop_exit
      _
    %1424 = vsyncpa [#allocation4], 1
    %s1425 = scalar_lea.sflag [#allocation4], 1
    %1426 = vsyncpa %s1425, 1
    %1427 = vsyncpa [#allocation7], 1
    %1428 = vsyncpa [#allocation10], 1
    %1429 = vsyncpa [#allocation13], 1
    %1430 = vsyncpa [#allocation5], 1
    %s1431 = scalar_lea.sflag [#allocation5], 1
    %1432 = vsyncpa %s1431, 1

</llo_original>
